<compile_context>
chip_gen: v5e
topology: v5e:2x2
jax: 0.10.0
libtpu: 0.0.40
codegen_flags: <defaults>
</compile_context>

<pallas_src>
import jax
import jax.numpy as jnp
import numpy as np
from jax.experimental import pallas as pl
from jax.experimental.pallas import tpu as pltpu


# ----------------------------------------------------------------------------
# Kernel: GRU recurrence over time for one batch tile + final Linear layer.
# ----------------------------------------------------------------------------
def _gru_fc_kernel(xp_ref, m_ref, wh_ref, bhn_ref, wfc_ref, bfc_ref, out_ref):
    """xp_ref : (T, Bt, 3H) f32  precomputed x-side gate pre-activations
                                 (embedding folded into W_i, biases included)
       m_ref  : (T, Bt, 1)  f32  1.0 while t < length, else 0.0
       wh_ref : (H, 3H)     f32  fused recurrent weight [W_hr|W_hz|W_hn]
       bhn_ref: (1, H)      f32  hidden bias of the n gate (stays inside r*(...))
       wfc_ref: (H, H), bfc_ref: (1, H)  final Linear
       out_ref: (Bt, H)     f32  fc(h at last valid step)
    """
    T, Bt, _ = xp_ref.shape
    H = out_ref.shape[1]

    wh = wh_ref[...]                                     # (H, 3H)
    bhn = jnp.broadcast_to(bhn_ref[...], (Bt, H))        # hoisted: broadcast once

    def step(t, h):
        xp = xp_ref[t]                                   # (Bt, 3H), x-side already done
        # single fused recurrent matmul for all three gates
        hp = jnp.dot(h, wh, preferred_element_type=jnp.float32)   # (Bt, 3H)
        r = jax.nn.sigmoid(xp[:, :H] + hp[:, :H])
        z = jax.nn.sigmoid(xp[:, H:2 * H] + hp[:, H:2 * H])
        n = jnp.tanh(xp[:, 2 * H:] + r * (hp[:, 2 * H:] + bhn))
        h_new = (1.0 - z) * n + z * h
        # packed-sequence semantics: freeze h once t >= length
        m = m_ref[t]                                     # (Bt, 1), broadcasts over H
        return m * h_new + (1.0 - m) * h

    h0 = jnp.zeros((Bt, H), jnp.float32)
    # T is static and small -> full unroll exposes cross-step ILP to the scheduler
    h_last = jax.lax.fori_loop(0, T, step, h0, unroll=True)

    out_ref[...] = (jnp.dot(h_last, wfc_ref[...],
                            preferred_element_type=jnp.float32) + bfc_ref[...])


# ----------------------------------------------------------------------------
# Wrapper: embedding folding, layout prep, batch padding, pallas_call.
# ----------------------------------------------------------------------------
def drug_sequence_encoder(sequence, params, *, b_tile=8):
    """sequence: (B, T) int32 tokens, 0 == padding (right-padded, lengths >= 1)."""
    B, T = sequence.shape
    emb_table = params["embedding"]                      # (V, E), row 0 zeros
    H = params["b_fc"].shape[-1]

    # ---- fold embedding + input projection + x-side biases (plain JAX glue) ----
    W_i_cat = jnp.concatenate(
        [params["W_ir"], params["W_iz"], params["W_in"]], axis=1)       # (E, 3H)
    b_i_cat = jnp.concatenate(
        [params["b_r"], params["b_z"], params["b_in"]], axis=1)         # (1, 3H)
    emb_proj = emb_table.astype(jnp.float32) @ W_i_cat + b_i_cat        # (V, 3H)

    W_h_cat = jnp.concatenate(
        [params["W_hr"], params["W_hz"], params["W_hn"]], axis=1)       # (H, 3H)

    # ---- pad batch to a sublane-aligned tile (padding rows have length 0) ----
    B_pad = ((B + b_tile - 1) // b_tile) * b_tile
    seq_p = jnp.zeros((B_pad, T), jnp.int32).at[:B, :].set(sequence)

    # gather precomputed gate pre-activations; kernel gets them time-major
    x_proj = jnp.take(emb_proj, seq_p, axis=0)                          # (B_pad, T, 3H)
    x_proj = jnp.transpose(x_proj, (1, 0, 2)).astype(jnp.float32)       # (T, B_pad, 3H)

    # precomputed {0,1} masks, one per step (hoists compare off the recurrence)
    lengths = (seq_p != 0).sum(axis=1).astype(jnp.int32)                # (B_pad,)
    mask = (jnp.arange(T, dtype=jnp.int32)[:, None] < lengths[None, :])
    mask = mask.astype(jnp.float32)[:, :, None]                         # (T, B_pad, 1)
    # TODO(synk): like pack_padded_sequence, zero-length sequences are not
    # supported (they would silently return fc(0) == b_fc).

    n_tiles = B_pad // b_tile
    cost = pl.CostEstimate(
        flops=2 * B_pad * T * H * 3 * H + 2 * B_pad * H * H,
        transcendentals=3 * B_pad * T * H,
        bytes_accessed=4 * (x_proj.size + mask.size + W_h_cat.size
                            + H + H * H + H + B_pad * H),
    )

    out_padded = pl.pallas_call(
        _gru_fc_kernel,
        out_shape=jax.ShapeDtypeStruct((B_pad, H), jnp.float32),
        grid=(n_tiles,),
        in_specs=[
            pl.BlockSpec((T, b_tile, 3 * H), lambda b: (0, b, 0)),   # x_proj
            pl.BlockSpec((T, b_tile, 1),     lambda b: (0, b, 0)),   # mask
            pl.BlockSpec((H, 3 * H),         lambda b: (0, 0)),      # W_h fused
            pl.BlockSpec((1, H),             lambda b: (0, 0)),      # b_hn
            pl.BlockSpec((H, H),             lambda b: (0, 0)),      # W_fc
            pl.BlockSpec((1, H),             lambda b: (0, 0)),      # b_fc
        ],
        out_specs=pl.BlockSpec((b_tile, H), lambda b: (b, 0)),
        compiler_params=pltpu.CompilerParams(
            dimension_semantics=("parallel",),       # batch tiles are independent
            vmem_limit_bytes=64 * 1024 * 1024,
        ),
        cost_estimate=cost,
    )(x_proj, mask, W_h_cat, params["b_hn"], params["W_fc"], params["b_fc"])

    return out_padded[:B]


# ----------------------------------------------------------------------------
# Parameter init (same shapes/semantics as the PyTorch module) and reference.
# ----------------------------------------------------------------------------
def _init_params(key, vocab_size, embedding_dim, hidden_dim):
    ks = jax.random.split(key, 8)
    k = 1.0 / np.sqrt(hidden_dim)

    emb = jax.random.normal(ks[0], (vocab_size, embedding_dim), jnp.float32)
    emb = emb.at[0].set(0.0)                             # padding_idx=0

    w_ih = jax.random.uniform(ks[1], (3 * hidden_dim, embedding_dim),
                              jnp.float32, -k, k)        # [r|z|n] stacked (PyTorch order)
    w_hh = jax.random.uniform(ks[2], (3 * hidden_dim, hidden_dim),
                              jnp.float32, -k, k)
    b_ih = jax.random.uniform(ks[3], (3 * hidden_dim,), jnp.float32, -k, k)
    b_hh = jax.random.uniform(ks[4], (3 * hidden_dim,), jnp.float32, -k, k)

    w_fc = jax.random.uniform(ks[5], (hidden_dim, hidden_dim), jnp.float32, -k, k)
    b_fc = jax.random.uniform(ks[6], (hidden_dim,), jnp.float32, -k, k)

    H = hidden_dim
    W_ir, W_iz, W_in = w_ih[:H], w_ih[H:2 * H], w_ih[2 * H:]
    W_hr, W_hz, W_hn = w_hh[:H], w_hh[H:2 * H], w_hh[2 * H:]
    b_ir, b_iz, b_in = b_ih[:H], b_ih[H:2 * H], b_ih[2 * H:]
    b_hr, b_hz, b_hn = b_hh[:H], b_hh[H:2 * H], b_hh[2 * H:]

    return {
        "embedding": emb,
        # transposed so the math is x @ W (MXU-friendly)
        "W_ir": W_ir.T, "W_iz": W_iz.T, "W_in": W_in.T,
        "W_hr": W_hr.T, "W_hz": W_hz.T, "W_hn": W_hn.T,
        # r/z gate biases can be pre-summed; n gate keeps input/hidden biases split
        "b_r": (b_ir + b_hr)[None, :],
        "b_z": (b_iz + b_hz)[None, :],
        "b_in": b_in[None, :],
        "b_hn": b_hn[None, :],
        "W_fc": w_fc.T,
        "b_fc": b_fc[None, :],
    }


def _reference(sequence, params):
    """Pure-JAX reference of the same semantics (per-gate, unfused)."""
    emb = jnp.take(params["embedding"], sequence, axis=0)    # (B, T, E)
    lengths = (sequence != 0).sum(axis=1).astype(jnp.int32)
    B, T, _ = emb.shape
    H = params["b_fc"].shape[-1]

    def step(h, inp):
        x_t, t = inp
        r = jax.nn.sigmoid(x_t @ params["W_ir"] + h @ params["W_hr"] + params["b_r"])
        z = jax.nn.sigmoid(x_t @ params["W_iz"] + h @ params["W_hz"] + params["b_z"])
        n = jnp.tanh(x_t @ params["W_in"] + params["b_in"]
                     + r * (h @ params["W_hn"] + params["b_hn"]))
        h_new = (1.0 - z) * n + z * h
        mask = (lengths > t)[:, None]
        h = jnp.where(mask, h_new, h)
        return h, None

    h0 = jnp.zeros((B, H), jnp.float32)
    x_tbe = jnp.transpose(emb, (1, 0, 2))
    h_last, _ = jax.lax.scan(step, h0, (x_tbe, jnp.arange(T)))
    return h_last @ params["W_fc"] + params["b_fc"]


if __name__ == "__main__":
    key = jax.random.PRNGKey(0)
    k_param, k_seq = jax.random.split(key)

    # Module defaults: embedding_dim = hidden_dim = 64, num_layers = 1.
    vocab_size, embedding_dim, hidden_dim = 20, 64, 64
    B, T = 4, 8

    params = _init_params(k_param, vocab_size, embedding_dim, hidden_dim)

    # Right-padded variable-length sequences, every sequence has length >= 1.
    tokens = jax.random.randint(k_seq, (B, T), 1, vocab_size, dtype=jnp.int32)
    lengths = jnp.array([8, 5, 3, 6], dtype=jnp.int32)
    pad_mask = jnp.arange(T)[None, :] < lengths[:, None]
    sequence = jnp.where(pad_mask, tokens, 0)

    out = jax.block_until_ready(drug_sequence_encoder(sequence, params))
    ref = jax.block_until_ready(_reference(sequence, params))

    assert out.shape == (B, hidden_dim)
    np.testing.assert_allclose(np.asarray(out), np.asarray(ref),
                               rtol=1e-4, atol=1e-5)

    print("KERNEL_OK")
</pallas_src>

<mosaic_0001>
module attributes {stable_mosaic.version = 11 : i64} {
  func.func @_gru_fc_kernel(%arg0: i32, %arg1: memref<8x8x192xf32, #tpu.memory_space<vmem>>, %arg2: memref<8x8x1xf32, #tpu.memory_space<vmem>>, %arg3: memref<64x192xf32, #tpu.memory_space<vmem>>, %arg4: memref<1x64xf32, #tpu.memory_space<vmem>>, %arg5: memref<64x64xf32, #tpu.memory_space<vmem>>, %arg6: memref<1x64xf32, #tpu.memory_space<vmem>>, %arg7: memref<8x64xf32, #tpu.memory_space<vmem>>) attributes {dimension_semantics = [#tpu.dimension_semantics<parallel>], iteration_bounds = array<i64: 1>, scalar_prefetch = 0 : i64, scratch_operands = 0 : i64, tpu.core_type = #tpu.core_type<tc>, window_params = [{transform_indices = @transform_0, window_bounds = array<i64: 8, 8, 192>}, {transform_indices = @transform_1, window_bounds = array<i64: 8, 8, 1>}, {pipeline_mode = #tpu.pipeline_mode<synchronous>, transform_indices = @transform_2, window_bounds = array<i64: 64, 192>}, {pipeline_mode = #tpu.pipeline_mode<synchronous>, transform_indices = @transform_3, window_bounds = array<i64: 1, 64>}, {pipeline_mode = #tpu.pipeline_mode<synchronous>, transform_indices = @transform_4, window_bounds = array<i64: 64, 64>}, {pipeline_mode = #tpu.pipeline_mode<synchronous>, transform_indices = @transform_5, window_bounds = array<i64: 1, 64>}, {transform_indices = @transform_6, window_bounds = array<i64: 8, 64>}]} {
    %c0 = arith.constant 0 : index
    %c0_0 = arith.constant 0 : index
    %0 = vector.load %arg3[%c0, %c0_0] : memref<64x192xf32, #tpu.memory_space<vmem>>, vector<64x192xf32>
    %c0_1 = arith.constant 0 : index
    %c0_2 = arith.constant 0 : index
    %1 = vector.load %arg4[%c0_1, %c0_2] : memref<1x64xf32, #tpu.memory_space<vmem>>, vector<1x64xf32>
    %2 = vector.shape_cast %1 : vector<1x64xf32> to vector<1x64xf32>
    %3 = vector.broadcast %2 : vector<1x64xf32> to vector<8x64xf32>
    %cst = arith.constant 0.000000e+00 : f32
    %4 = vector.broadcast %cst : f32 to vector<8x64xf32>
    %c0_i32 = arith.constant 0 : i32
    %5 = arith.index_cast %c0_i32 : i32 to index
    %c0_3 = arith.constant 0 : index
    %c0_4 = arith.constant 0 : index
    %6 = vector.load %arg1[%5, %c0_3, %c0_4] : memref<8x8x192xf32, #tpu.memory_space<vmem>>, vector<1x8x192xf32>
    %7 = vector.shape_cast %6 : vector<1x8x192xf32> to vector<8x192xf32>
    %cst_5 = arith.constant dense<0.000000e+00> : vector<8x192xf32>
    %8 = tpu.matmul %4, %0, %cst_5 {dimension_numbers = #tpu.dot_dimension_numbers<[1], [0], [0], [1], [0, 0, 1, 1], [], []>} : vector<8x64xf32>, vector<64x192xf32>, vector<8x192xf32> -> vector<8x192xf32>
    %9 = vector.extract_strided_slice %7 {offsets = [0, 0], sizes = [8, 64], strides = [1, 1]} : vector<8x192xf32> to vector<8x64xf32>
    %10 = vector.extract_strided_slice %8 {offsets = [0, 0], sizes = [8, 64], strides = [1, 1]} : vector<8x192xf32> to vector<8x64xf32>
    %11 = arith.addf %9, %10 : vector<8x64xf32>
    %12 = arith.negf %11 : vector<8x64xf32>
    %13 = math.exp %12 : vector<8x64xf32>
    %cst_6 = arith.constant 1.000000e+00 : f32
    %14 = vector.broadcast %cst_6 : f32 to vector<8x64xf32>
    %15 = arith.addf %14, %13 : vector<8x64xf32>
    %16 = arith.divf %14, %15 : vector<8x64xf32>
    %17 = vector.extract_strided_slice %7 {offsets = [0, 64], sizes = [8, 64], strides = [1, 1]} : vector<8x192xf32> to vector<8x64xf32>
    %18 = vector.extract_strided_slice %8 {offsets = [0, 64], sizes = [8, 64], strides = [1, 1]} : vector<8x192xf32> to vector<8x64xf32>
    %19 = arith.addf %17, %18 : vector<8x64xf32>
    %20 = arith.negf %19 : vector<8x64xf32>
    %21 = math.exp %20 : vector<8x64xf32>
    %cst_7 = arith.constant 1.000000e+00 : f32
    %22 = vector.broadcast %cst_7 : f32 to vector<8x64xf32>
    %23 = arith.addf %22, %21 : vector<8x64xf32>
    %24 = arith.divf %22, %23 : vector<8x64xf32>
    %25 = vector.extract_strided_slice %7 {offsets = [0, 128], sizes = [8, 64], strides = [1, 1]} : vector<8x192xf32> to vector<8x64xf32>
    %26 = vector.extract_strided_slice %8 {offsets = [0, 128], sizes = [8, 64], strides = [1, 1]} : vector<8x192xf32> to vector<8x64xf32>
    %27 = arith.addf %26, %3 : vector<8x64xf32>
    %28 = arith.mulf %16, %27 : vector<8x64xf32>
    %29 = arith.addf %25, %28 : vector<8x64xf32>
    %30 = math.tanh %29 : vector<8x64xf32>
    %cst_8 = arith.constant 1.000000e+00 : f32
    %31 = vector.broadcast %cst_8 : f32 to vector<8x64xf32>
    %32 = arith.subf %31, %24 : vector<8x64xf32>
    %33 = arith.mulf %32, %30 : vector<8x64xf32>
    %34 = arith.mulf %24, %4 : vector<8x64xf32>
    %35 = arith.addf %33, %34 : vector<8x64xf32>
    %36 = arith.index_cast %c0_i32 : i32 to index
    %c0_9 = arith.constant 0 : index
    %c0_10 = arith.constant 0 : index
    %37 = vector.load %arg2[%36, %c0_9, %c0_10] : memref<8x8x1xf32, #tpu.memory_space<vmem>>, vector<1x8x1xf32>
    %38 = vector.shape_cast %37 : vector<1x8x1xf32> to vector<8x1xf32>
    %39 = vector.broadcast %38 : vector<8x1xf32> to vector<8x64xf32>
    %40 = arith.mulf %39, %35 : vector<8x64xf32>
    %cst_11 = arith.constant 1.000000e+00 : f32
    %41 = vector.broadcast %cst_11 : f32 to vector<8x1xf32>
    %42 = arith.subf %41, %38 : vector<8x1xf32>
    %43 = vector.broadcast %42 : vector<8x1xf32> to vector<8x64xf32>
    %44 = arith.mulf %43, %4 : vector<8x64xf32>
    %45 = arith.addf %40, %44 : vector<8x64xf32>
    %c1_i32 = arith.constant 1 : i32
    %46 = arith.index_cast %c1_i32 : i32 to index
    %c0_12 = arith.constant 0 : index
    %c0_13 = arith.constant 0 : index
    %47 = vector.load %arg1[%46, %c0_12, %c0_13] : memref<8x8x192xf32, #tpu.memory_space<vmem>>, vector<1x8x192xf32>
    %48 = vector.shape_cast %47 : vector<1x8x192xf32> to vector<8x192xf32>
    %cst_14 = arith.constant dense<0.000000e+00> : vector<8x192xf32>
    %49 = tpu.matmul %45, %0, %cst_14 {dimension_numbers = #tpu.dot_dimension_numbers<[1], [0], [0], [1], [0, 0, 1, 1], [], []>} : vector<8x64xf32>, vector<64x192xf32>, vector<8x192xf32> -> vector<8x192xf32>
    %50 = vector.extract_strided_slice %48 {offsets = [0, 0], sizes = [8, 64], strides = [1, 1]} : vector<8x192xf32> to vector<8x64xf32>
    %51 = vector.extract_strided_slice %49 {offsets = [0, 0], sizes = [8, 64], strides = [1, 1]} : vector<8x192xf32> to vector<8x64xf32>
    %52 = arith.addf %50, %51 : vector<8x64xf32>
    %53 = arith.negf %52 : vector<8x64xf32>
    %54 = math.exp %53 : vector<8x64xf32>
    %cst_15 = arith.constant 1.000000e+00 : f32
    %55 = vector.broadcast %cst_15 : f32 to vector<8x64xf32>
    %56 = arith.addf %55, %54 : vector<8x64xf32>
    %57 = arith.divf %55, %56 : vector<8x64xf32>
    %58 = vector.extract_strided_slice %48 {offsets = [0, 64], sizes = [8, 64], strides = [1, 1]} : vector<8x192xf32> to vector<8x64xf32>
    %59 = vector.extract_strided_slice %49 {offsets = [0, 64], sizes = [8, 64], strides = [1, 1]} : vector<8x192xf32> to vector<8x64xf32>
    %60 = arith.addf %58, %59 : vector<8x64xf32>
    %61 = arith.negf %60 : vector<8x64xf32>
    %62 = math.exp %61 : vector<8x64xf32>
    %cst_16 = arith.constant 1.000000e+00 : f32
    %63 = vector.broadcast %cst_16 : f32 to vector<8x64xf32>
    %64 = arith.addf %63, %62 : vector<8x64xf32>
    %65 = arith.divf %63, %64 : vector<8x64xf32>
    %66 = vector.extract_strided_slice %48 {offsets = [0, 128], sizes = [8, 64], strides = [1, 1]} : vector<8x192xf32> to vector<8x64xf32>
    %67 = vector.extract_strided_slice %49 {offsets = [0, 128], sizes = [8, 64], strides = [1, 1]} : vector<8x192xf32> to vector<8x64xf32>
    %68 = arith.addf %67, %3 : vector<8x64xf32>
    %69 = arith.mulf %57, %68 : vector<8x64xf32>
    %70 = arith.addf %66, %69 : vector<8x64xf32>
    %71 = math.tanh %70 : vector<8x64xf32>
    %cst_17 = arith.constant 1.000000e+00 : f32
    %72 = vector.broadcast %cst_17 : f32 to vector<8x64xf32>
    %73 = arith.subf %72, %65 : vector<8x64xf32>
    %74 = arith.mulf %73, %71 : vector<8x64xf32>
    %75 = arith.mulf %65, %45 : vector<8x64xf32>
    %76 = arith.addf %74, %75 : vector<8x64xf32>
    %77 = arith.index_cast %c1_i32 : i32 to index
    %c0_18 = arith.constant 0 : index
    %c0_19 = arith.constant 0 : index
    %78 = vector.load %arg2[%77, %c0_18, %c0_19] : memref<8x8x1xf32, #tpu.memory_space<vmem>>, vector<1x8x1xf32>
    %79 = vector.shape_cast %78 : vector<1x8x1xf32> to vector<8x1xf32>
    %80 = vector.broadcast %79 : vector<8x1xf32> to vector<8x64xf32>
    %81 = arith.mulf %80, %76 : vector<8x64xf32>
    %cst_20 = arith.constant 1.000000e+00 : f32
    %82 = vector.broadcast %cst_20 : f32 to vector<8x1xf32>
    %83 = arith.subf %82, %79 : vector<8x1xf32>
    %84 = vector.broadcast %83 : vector<8x1xf32> to vector<8x64xf32>
    %85 = arith.mulf %84, %45 : vector<8x64xf32>
    %86 = arith.addf %81, %85 : vector<8x64xf32>
    %c2_i32 = arith.constant 2 : i32
    %87 = arith.index_cast %c2_i32 : i32 to index
    %c0_21 = arith.constant 0 : index
    %c0_22 = arith.constant 0 : index
    %88 = vector.load %arg1[%87, %c0_21, %c0_22] : memref<8x8x192xf32, #tpu.memory_space<vmem>>, vector<1x8x192xf32>
    %89 = vector.shape_cast %88 : vector<1x8x192xf32> to vector<8x192xf32>
    %cst_23 = arith.constant dense<0.000000e+00> : vector<8x192xf32>
    %90 = tpu.matmul %86, %0, %cst_23 {dimension_numbers = #tpu.dot_dimension_numbers<[1], [0], [0], [1], [0, 0, 1, 1], [], []>} : vector<8x64xf32>, vector<64x192xf32>, vector<8x192xf32> -> vector<8x192xf32>
    %91 = vector.extract_strided_slice %89 {offsets = [0, 0], sizes = [8, 64], strides = [1, 1]} : vector<8x192xf32> to vector<8x64xf32>
    %92 = vector.extract_strided_slice %90 {offsets = [0, 0], sizes = [8, 64], strides = [1, 1]} : vector<8x192xf32> to vector<8x64xf32>
    %93 = arith.addf %91, %92 : vector<8x64xf32>
    %94 = arith.negf %93 : vector<8x64xf32>
    %95 = math.exp %94 : vector<8x64xf32>
    %cst_24 = arith.constant 1.000000e+00 : f32
    %96 = vector.broadcast %cst_24 : f32 to vector<8x64xf32>
    %97 = arith.addf %96, %95 : vector<8x64xf32>
    %98 = arith.divf %96, %97 : vector<8x64xf32>
    %99 = vector.extract_strided_slice %89 {offsets = [0, 64], sizes = [8, 64], strides = [1, 1]} : vector<8x192xf32> to vector<8x64xf32>
    %100 = vector.extract_strided_slice %90 {offsets = [0, 64], sizes = [8, 64], strides = [1, 1]} : vector<8x192xf32> to vector<8x64xf32>
    %101 = arith.addf %99, %100 : vector<8x64xf32>
    %102 = arith.negf %101 : vector<8x64xf32>
    %103 = math.exp %102 : vector<8x64xf32>
    %cst_25 = arith.constant 1.000000e+00 : f32
    %104 = vector.broadcast %cst_25 : f32 to vector<8x64xf32>
    %105 = arith.addf %104, %103 : vector<8x64xf32>
    %106 = arith.divf %104, %105 : vector<8x64xf32>
    %107 = vector.extract_strided_slice %89 {offsets = [0, 128], sizes = [8, 64], strides = [1, 1]} : vector<8x192xf32> to vector<8x64xf32>
    %108 = vector.extract_strided_slice %90 {offsets = [0, 128], sizes = [8, 64], strides = [1, 1]} : vector<8x192xf32> to vector<8x64xf32>
    %109 = arith.addf %108, %3 : vector<8x64xf32>
    %110 = arith.mulf %98, %109 : vector<8x64xf32>
    %111 = arith.addf %107, %110 : vector<8x64xf32>
    %112 = math.tanh %111 : vector<8x64xf32>
    %cst_26 = arith.constant 1.000000e+00 : f32
    %113 = vector.broadcast %cst_26 : f32 to vector<8x64xf32>
    %114 = arith.subf %113, %106 : vector<8x64xf32>
    %115 = arith.mulf %114, %112 : vector<8x64xf32>
    %116 = arith.mulf %106, %86 : vector<8x64xf32>
    %117 = arith.addf %115, %116 : vector<8x64xf32>
    %118 = arith.index_cast %c2_i32 : i32 to index
    %c0_27 = arith.constant 0 : index
    %c0_28 = arith.constant 0 : index
    %119 = vector.load %arg2[%118, %c0_27, %c0_28] : memref<8x8x1xf32, #tpu.memory_space<vmem>>, vector<1x8x1xf32>
    %120 = vector.shape_cast %119 : vector<1x8x1xf32> to vector<8x1xf32>
    %121 = vector.broadcast %120 : vector<8x1xf32> to vector<8x64xf32>
    %122 = arith.mulf %121, %117 : vector<8x64xf32>
    %cst_29 = arith.constant 1.000000e+00 : f32
    %123 = vector.broadcast %cst_29 : f32 to vector<8x1xf32>
    %124 = arith.subf %123, %120 : vector<8x1xf32>
    %125 = vector.broadcast %124 : vector<8x1xf32> to vector<8x64xf32>
    %126 = arith.mulf %125, %86 : vector<8x64xf32>
    %127 = arith.addf %122, %126 : vector<8x64xf32>
    %c3_i32 = arith.constant 3 : i32
    %128 = arith.index_cast %c3_i32 : i32 to index
    %c0_30 = arith.constant 0 : index
    %c0_31 = arith.constant 0 : index
    %129 = vector.load %arg1[%128, %c0_30, %c0_31] : memref<8x8x192xf32, #tpu.memory_space<vmem>>, vector<1x8x192xf32>
    %130 = vector.shape_cast %129 : vector<1x8x192xf32> to vector<8x192xf32>
    %cst_32 = arith.constant dense<0.000000e+00> : vector<8x192xf32>
    %131 = tpu.matmul %127, %0, %cst_32 {dimension_numbers = #tpu.dot_dimension_numbers<[1], [0], [0], [1], [0, 0, 1, 1], [], []>} : vector<8x64xf32>, vector<64x192xf32>, vector<8x192xf32> -> vector<8x192xf32>
    %132 = vector.extract_strided_slice %130 {offsets = [0, 0], sizes = [8, 64], strides = [1, 1]} : vector<8x192xf32> to vector<8x64xf32>
    %133 = vector.extract_strided_slice %131 {offsets = [0, 0], sizes = [8, 64], strides = [1, 1]} : vector<8x192xf32> to vector<8x64xf32>
    %134 = arith.addf %132, %133 : vector<8x64xf32>
    %135 = arith.negf %134 : vector<8x64xf32>
    %136 = math.exp %135 : vector<8x64xf32>
    %cst_33 = arith.constant 1.000000e+00 : f32
    %137 = vector.broadcast %cst_33 : f32 to vector<8x64xf32>
    %138 = arith.addf %137, %136 : vector<8x64xf32>
    %139 = arith.divf %137, %138 : vector<8x64xf32>
    %140 = vector.extract_strided_slice %130 {offsets = [0, 64], sizes = [8, 64], strides = [1, 1]} : vector<8x192xf32> to vector<8x64xf32>
    %141 = vector.extract_strided_slice %131 {offsets = [0, 64], sizes = [8, 64], strides = [1, 1]} : vector<8x192xf32> to vector<8x64xf32>
    %142 = arith.addf %140, %141 : vector<8x64xf32>
    %143 = arith.negf %142 : vector<8x64xf32>
    %144 = math.exp %143 : vector<8x64xf32>
    %cst_34 = arith.constant 1.000000e+00 : f32
    %145 = vector.broadcast %cst_34 : f32 to vector<8x64xf32>
    %146 = arith.addf %145, %144 : vector<8x64xf32>
    %147 = arith.divf %145, %146 : vector<8x64xf32>
    %148 = vector.extract_strided_slice %130 {offsets = [0, 128], sizes = [8, 64], strides = [1, 1]} : vector<8x192xf32> to vector<8x64xf32>
    %149 = vector.extract_strided_slice %131 {offsets = [0, 128], sizes = [8, 64], strides = [1, 1]} : vector<8x192xf32> to vector<8x64xf32>
    %150 = arith.addf %149, %3 : vector<8x64xf32>
    %151 = arith.mulf %139, %150 : vector<8x64xf32>
    %152 = arith.addf %148, %151 : vector<8x64xf32>
    %153 = math.tanh %152 : vector<8x64xf32>
    %cst_35 = arith.constant 1.000000e+00 : f32
    %154 = vector.broadcast %cst_35 : f32 to vector<8x64xf32>
    %155 = arith.subf %154, %147 : vector<8x64xf32>
    %156 = arith.mulf %155, %153 : vector<8x64xf32>
    %157 = arith.mulf %147, %127 : vector<8x64xf32>
    %158 = arith.addf %156, %157 : vector<8x64xf32>
    %159 = arith.index_cast %c3_i32 : i32 to index
    %c0_36 = arith.constant 0 : index
    %c0_37 = arith.constant 0 : index
    %160 = vector.load %arg2[%159, %c0_36, %c0_37] : memref<8x8x1xf32, #tpu.memory_space<vmem>>, vector<1x8x1xf32>
    %161 = vector.shape_cast %160 : vector<1x8x1xf32> to vector<8x1xf32>
    %162 = vector.broadcast %161 : vector<8x1xf32> to vector<8x64xf32>
    %163 = arith.mulf %162, %158 : vector<8x64xf32>
    %cst_38 = arith.constant 1.000000e+00 : f32
    %164 = vector.broadcast %cst_38 : f32 to vector<8x1xf32>
    %165 = arith.subf %164, %161 : vector<8x1xf32>
    %166 = vector.broadcast %165 : vector<8x1xf32> to vector<8x64xf32>
    %167 = arith.mulf %166, %127 : vector<8x64xf32>
    %168 = arith.addf %163, %167 : vector<8x64xf32>
    %c4_i32 = arith.constant 4 : i32
    %169 = arith.index_cast %c4_i32 : i32 to index
    %c0_39 = arith.constant 0 : index
    %c0_40 = arith.constant 0 : index
    %170 = vector.load %arg1[%169, %c0_39, %c0_40] : memref<8x8x192xf32, #tpu.memory_space<vmem>>, vector<1x8x192xf32>
    %171 = vector.shape_cast %170 : vector<1x8x192xf32> to vector<8x192xf32>
    %cst_41 = arith.constant dense<0.000000e+00> : vector<8x192xf32>
    %172 = tpu.matmul %168, %0, %cst_41 {dimension_numbers = #tpu.dot_dimension_numbers<[1], [0], [0], [1], [0, 0, 1, 1], [], []>} : vector<8x64xf32>, vector<64x192xf32>, vector<8x192xf32> -> vector<8x192xf32>
    %173 = vector.extract_strided_slice %171 {offsets = [0, 0], sizes = [8, 64], strides = [1, 1]} : vector<8x192xf32> to vector<8x64xf32>
    %174 = vector.extract_strided_slice %172 {offsets = [0, 0], sizes = [8, 64], strides = [1, 1]} : vector<8x192xf32> to vector<8x64xf32>
    %175 = arith.addf %173, %174 : vector<8x64xf32>
    %176 = arith.negf %175 : vector<8x64xf32>
    %177 = math.exp %176 : vector<8x64xf32>
    %cst_42 = arith.constant 1.000000e+00 : f32
    %178 = vector.broadcast %cst_42 : f32 to vector<8x64xf32>
    %179 = arith.addf %178, %177 : vector<8x64xf32>
    %180 = arith.divf %178, %179 : vector<8x64xf32>
    %181 = vector.extract_strided_slice %171 {offsets = [0, 64], sizes = [8, 64], strides = [1, 1]} : vector<8x192xf32> to vector<8x64xf32>
    %182 = vector.extract_strided_slice %172 {offsets = [0, 64], sizes = [8, 64], strides = [1, 1]} : vector<8x192xf32> to vector<8x64xf32>
    %183 = arith.addf %181, %182 : vector<8x64xf32>
    %184 = arith.negf %183 : vector<8x64xf32>
    %185 = math.exp %184 : vector<8x64xf32>
    %cst_43 = arith.constant 1.000000e+00 : f32
    %186 = vector.broadcast %cst_43 : f32 to vector<8x64xf32>
    %187 = arith.addf %186, %185 : vector<8x64xf32>
    %188 = arith.divf %186, %187 : vector<8x64xf32>
    %189 = vector.extract_strided_slice %171 {offsets = [0, 128], sizes = [8, 64], strides = [1, 1]} : vector<8x192xf32> to vector<8x64xf32>
    %190 = vector.extract_strided_slice %172 {offsets = [0, 128], sizes = [8, 64], strides = [1, 1]} : vector<8x192xf32> to vector<8x64xf32>
    %191 = arith.addf %190, %3 : vector<8x64xf32>
    %192 = arith.mulf %180, %191 : vector<8x64xf32>
    %193 = arith.addf %189, %192 : vector<8x64xf32>
    %194 = math.tanh %193 : vector<8x64xf32>
    %cst_44 = arith.constant 1.000000e+00 : f32
    %195 = vector.broadcast %cst_44 : f32 to vector<8x64xf32>
    %196 = arith.subf %195, %188 : vector<8x64xf32>
    %197 = arith.mulf %196, %194 : vector<8x64xf32>
    %198 = arith.mulf %188, %168 : vector<8x64xf32>
    %199 = arith.addf %197, %198 : vector<8x64xf32>
    %200 = arith.index_cast %c4_i32 : i32 to index
    %c0_45 = arith.constant 0 : index
    %c0_46 = arith.constant 0 : index
    %201 = vector.load %arg2[%200, %c0_45, %c0_46] : memref<8x8x1xf32, #tpu.memory_space<vmem>>, vector<1x8x1xf32>
    %202 = vector.shape_cast %201 : vector<1x8x1xf32> to vector<8x1xf32>
    %203 = vector.broadcast %202 : vector<8x1xf32> to vector<8x64xf32>
    %204 = arith.mulf %203, %199 : vector<8x64xf32>
    %cst_47 = arith.constant 1.000000e+00 : f32
    %205 = vector.broadcast %cst_47 : f32 to vector<8x1xf32>
    %206 = arith.subf %205, %202 : vector<8x1xf32>
    %207 = vector.broadcast %206 : vector<8x1xf32> to vector<8x64xf32>
    %208 = arith.mulf %207, %168 : vector<8x64xf32>
    %209 = arith.addf %204, %208 : vector<8x64xf32>
    %c5_i32 = arith.constant 5 : i32
    %210 = arith.index_cast %c5_i32 : i32 to index
    %c0_48 = arith.constant 0 : index
    %c0_49 = arith.constant 0 : index
    %211 = vector.load %arg1[%210, %c0_48, %c0_49] : memref<8x8x192xf32, #tpu.memory_space<vmem>>, vector<1x8x192xf32>
    %212 = vector.shape_cast %211 : vector<1x8x192xf32> to vector<8x192xf32>
    %cst_50 = arith.constant dense<0.000000e+00> : vector<8x192xf32>
    %213 = tpu.matmul %209, %0, %cst_50 {dimension_numbers = #tpu.dot_dimension_numbers<[1], [0], [0], [1], [0, 0, 1, 1], [], []>} : vector<8x64xf32>, vector<64x192xf32>, vector<8x192xf32> -> vector<8x192xf32>
    %214 = vector.extract_strided_slice %212 {offsets = [0, 0], sizes = [8, 64], strides = [1, 1]} : vector<8x192xf32> to vector<8x64xf32>
    %215 = vector.extract_strided_slice %213 {offsets = [0, 0], sizes = [8, 64], strides = [1, 1]} : vector<8x192xf32> to vector<8x64xf32>
    %216 = arith.addf %214, %215 : vector<8x64xf32>
    %217 = arith.negf %216 : vector<8x64xf32>
    %218 = math.exp %217 : vector<8x64xf32>
    %cst_51 = arith.constant 1.000000e+00 : f32
    %219 = vector.broadcast %cst_51 : f32 to vector<8x64xf32>
    %220 = arith.addf %219, %218 : vector<8x64xf32>
    %221 = arith.divf %219, %220 : vector<8x64xf32>
    %222 = vector.extract_strided_slice %212 {offsets = [0, 64], sizes = [8, 64], strides = [1, 1]} : vector<8x192xf32> to vector<8x64xf32>
    %223 = vector.extract_strided_slice %213 {offsets = [0, 64], sizes = [8, 64], strides = [1, 1]} : vector<8x192xf32> to vector<8x64xf32>
    %224 = arith.addf %222, %223 : vector<8x64xf32>
    %225 = arith.negf %224 : vector<8x64xf32>
    %226 = math.exp %225 : vector<8x64xf32>
    %cst_52 = arith.constant 1.000000e+00 : f32
    %227 = vector.broadcast %cst_52 : f32 to vector<8x64xf32>
    %228 = arith.addf %227, %226 : vector<8x64xf32>
    %229 = arith.divf %227, %228 : vector<8x64xf32>
    %230 = vector.extract_strided_slice %212 {offsets = [0, 128], sizes = [8, 64], strides = [1, 1]} : vector<8x192xf32> to vector<8x64xf32>
    %231 = vector.extract_strided_slice %213 {offsets = [0, 128], sizes = [8, 64], strides = [1, 1]} : vector<8x192xf32> to vector<8x64xf32>
    %232 = arith.addf %231, %3 : vector<8x64xf32>
    %233 = arith.mulf %221, %232 : vector<8x64xf32>
    %234 = arith.addf %230, %233 : vector<8x64xf32>
    %235 = math.tanh %234 : vector<8x64xf32>
    %cst_53 = arith.constant 1.000000e+00 : f32
    %236 = vector.broadcast %cst_53 : f32 to vector<8x64xf32>
    %237 = arith.subf %236, %229 : vector<8x64xf32>
    %238 = arith.mulf %237, %235 : vector<8x64xf32>
    %239 = arith.mulf %229, %209 : vector<8x64xf32>
    %240 = arith.addf %238, %239 : vector<8x64xf32>
    %241 = arith.index_cast %c5_i32 : i32 to index
    %c0_54 = arith.constant 0 : index
    %c0_55 = arith.constant 0 : index
    %242 = vector.load %arg2[%241, %c0_54, %c0_55] : memref<8x8x1xf32, #tpu.memory_space<vmem>>, vector<1x8x1xf32>
    %243 = vector.shape_cast %242 : vector<1x8x1xf32> to vector<8x1xf32>
    %244 = vector.broadcast %243 : vector<8x1xf32> to vector<8x64xf32>
    %245 = arith.mulf %244, %240 : vector<8x64xf32>
    %cst_56 = arith.constant 1.000000e+00 : f32
    %246 = vector.broadcast %cst_56 : f32 to vector<8x1xf32>
    %247 = arith.subf %246, %243 : vector<8x1xf32>
    %248 = vector.broadcast %247 : vector<8x1xf32> to vector<8x64xf32>
    %249 = arith.mulf %248, %209 : vector<8x64xf32>
    %250 = arith.addf %245, %249 : vector<8x64xf32>
    %c6_i32 = arith.constant 6 : i32
    %251 = arith.index_cast %c6_i32 : i32 to index
    %c0_57 = arith.constant 0 : index
    %c0_58 = arith.constant 0 : index
    %252 = vector.load %arg1[%251, %c0_57, %c0_58] : memref<8x8x192xf32, #tpu.memory_space<vmem>>, vector<1x8x192xf32>
    %253 = vector.shape_cast %252 : vector<1x8x192xf32> to vector<8x192xf32>
    %cst_59 = arith.constant dense<0.000000e+00> : vector<8x192xf32>
    %254 = tpu.matmul %250, %0, %cst_59 {dimension_numbers = #tpu.dot_dimension_numbers<[1], [0], [0], [1], [0, 0, 1, 1], [], []>} : vector<8x64xf32>, vector<64x192xf32>, vector<8x192xf32> -> vector<8x192xf32>
    %255 = vector.extract_strided_slice %253 {offsets = [0, 0], sizes = [8, 64], strides = [1, 1]} : vector<8x192xf32> to vector<8x64xf32>
    %256 = vector.extract_strided_slice %254 {offsets = [0, 0], sizes = [8, 64], strides = [1, 1]} : vector<8x192xf32> to vector<8x64xf32>
    %257 = arith.addf %255, %256 : vector<8x64xf32>
    %258 = arith.negf %257 : vector<8x64xf32>
    %259 = math.exp %258 : vector<8x64xf32>
    %cst_60 = arith.constant 1.000000e+00 : f32
    %260 = vector.broadcast %cst_60 : f32 to vector<8x64xf32>
    %261 = arith.addf %260, %259 : vector<8x64xf32>
    %262 = arith.divf %260, %261 : vector<8x64xf32>
    %263 = vector.extract_strided_slice %253 {offsets = [0, 64], sizes = [8, 64], strides = [1, 1]} : vector<8x192xf32> to vector<8x64xf32>
    %264 = vector.extract_strided_slice %254 {offsets = [0, 64], sizes = [8, 64], strides = [1, 1]} : vector<8x192xf32> to vector<8x64xf32>
    %265 = arith.addf %263, %264 : vector<8x64xf32>
    %266 = arith.negf %265 : vector<8x64xf32>
    %267 = math.exp %266 : vector<8x64xf32>
    %cst_61 = arith.constant 1.000000e+00 : f32
    %268 = vector.broadcast %cst_61 : f32 to vector<8x64xf32>
    %269 = arith.addf %268, %267 : vector<8x64xf32>
    %270 = arith.divf %268, %269 : vector<8x64xf32>
    %271 = vector.extract_strided_slice %253 {offsets = [0, 128], sizes = [8, 64], strides = [1, 1]} : vector<8x192xf32> to vector<8x64xf32>
    %272 = vector.extract_strided_slice %254 {offsets = [0, 128], sizes = [8, 64], strides = [1, 1]} : vector<8x192xf32> to vector<8x64xf32>
    %273 = arith.addf %272, %3 : vector<8x64xf32>
    %274 = arith.mulf %262, %273 : vector<8x64xf32>
    %275 = arith.addf %271, %274 : vector<8x64xf32>
    %276 = math.tanh %275 : vector<8x64xf32>
    %cst_62 = arith.constant 1.000000e+00 : f32
    %277 = vector.broadcast %cst_62 : f32 to vector<8x64xf32>
    %278 = arith.subf %277, %270 : vector<8x64xf32>
    %279 = arith.mulf %278, %276 : vector<8x64xf32>
    %280 = arith.mulf %270, %250 : vector<8x64xf32>
    %281 = arith.addf %279, %280 : vector<8x64xf32>
    %282 = arith.index_cast %c6_i32 : i32 to index
    %c0_63 = arith.constant 0 : index
    %c0_64 = arith.constant 0 : index
    %283 = vector.load %arg2[%282, %c0_63, %c0_64] : memref<8x8x1xf32, #tpu.memory_space<vmem>>, vector<1x8x1xf32>
    %284 = vector.shape_cast %283 : vector<1x8x1xf32> to vector<8x1xf32>
    %285 = vector.broadcast %284 : vector<8x1xf32> to vector<8x64xf32>
    %286 = arith.mulf %285, %281 : vector<8x64xf32>
    %cst_65 = arith.constant 1.000000e+00 : f32
    %287 = vector.broadcast %cst_65 : f32 to vector<8x1xf32>
    %288 = arith.subf %287, %284 : vector<8x1xf32>
    %289 = vector.broadcast %288 : vector<8x1xf32> to vector<8x64xf32>
    %290 = arith.mulf %289, %250 : vector<8x64xf32>
    %291 = arith.addf %286, %290 : vector<8x64xf32>
    %c7_i32 = arith.constant 7 : i32
    %292 = arith.index_cast %c7_i32 : i32 to index
    %c0_66 = arith.constant 0 : index
    %c0_67 = arith.constant 0 : index
    %293 = vector.load %arg1[%292, %c0_66, %c0_67] : memref<8x8x192xf32, #tpu.memory_space<vmem>>, vector<1x8x192xf32>
    %294 = vector.shape_cast %293 : vector<1x8x192xf32> to vector<8x192xf32>
    %cst_68 = arith.constant dense<0.000000e+00> : vector<8x192xf32>
    %295 = tpu.matmul %291, %0, %cst_68 {dimension_numbers = #tpu.dot_dimension_numbers<[1], [0], [0], [1], [0, 0, 1, 1], [], []>} : vector<8x64xf32>, vector<64x192xf32>, vector<8x192xf32> -> vector<8x192xf32>
    %296 = vector.extract_strided_slice %294 {offsets = [0, 0], sizes = [8, 64], strides = [1, 1]} : vector<8x192xf32> to vector<8x64xf32>
    %297 = vector.extract_strided_slice %295 {offsets = [0, 0], sizes = [8, 64], strides = [1, 1]} : vector<8x192xf32> to vector<8x64xf32>
    %298 = arith.addf %296, %297 : vector<8x64xf32>
    %299 = arith.negf %298 : vector<8x64xf32>
    %300 = math.exp %299 : vector<8x64xf32>
    %cst_69 = arith.constant 1.000000e+00 : f32
    %301 = vector.broadcast %cst_69 : f32 to vector<8x64xf32>
    %302 = arith.addf %301, %300 : vector<8x64xf32>
    %303 = arith.divf %301, %302 : vector<8x64xf32>
    %304 = vector.extract_strided_slice %294 {offsets = [0, 64], sizes = [8, 64], strides = [1, 1]} : vector<8x192xf32> to vector<8x64xf32>
    %305 = vector.extract_strided_slice %295 {offsets = [0, 64], sizes = [8, 64], strides = [1, 1]} : vector<8x192xf32> to vector<8x64xf32>
    %306 = arith.addf %304, %305 : vector<8x64xf32>
    %307 = arith.negf %306 : vector<8x64xf32>
    %308 = math.exp %307 : vector<8x64xf32>
    %cst_70 = arith.constant 1.000000e+00 : f32
    %309 = vector.broadcast %cst_70 : f32 to vector<8x64xf32>
    %310 = arith.addf %309, %308 : vector<8x64xf32>
    %311 = arith.divf %309, %310 : vector<8x64xf32>
    %312 = vector.extract_strided_slice %294 {offsets = [0, 128], sizes = [8, 64], strides = [1, 1]} : vector<8x192xf32> to vector<8x64xf32>
    %313 = vector.extract_strided_slice %295 {offsets = [0, 128], sizes = [8, 64], strides = [1, 1]} : vector<8x192xf32> to vector<8x64xf32>
    %314 = arith.addf %313, %3 : vector<8x64xf32>
    %315 = arith.mulf %303, %314 : vector<8x64xf32>
    %316 = arith.addf %312, %315 : vector<8x64xf32>
    %317 = math.tanh %316 : vector<8x64xf32>
    %cst_71 = arith.constant 1.000000e+00 : f32
    %318 = vector.broadcast %cst_71 : f32 to vector<8x64xf32>
    %319 = arith.subf %318, %311 : vector<8x64xf32>
    %320 = arith.mulf %319, %317 : vector<8x64xf32>
    %321 = arith.mulf %311, %291 : vector<8x64xf32>
    %322 = arith.addf %320, %321 : vector<8x64xf32>
    %323 = arith.index_cast %c7_i32 : i32 to index
    %c0_72 = arith.constant 0 : index
    %c0_73 = arith.constant 0 : index
    %324 = vector.load %arg2[%323, %c0_72, %c0_73] : memref<8x8x1xf32, #tpu.memory_space<vmem>>, vector<1x8x1xf32>
    %325 = vector.shape_cast %324 : vector<1x8x1xf32> to vector<8x1xf32>
    %326 = vector.broadcast %325 : vector<8x1xf32> to vector<8x64xf32>
    %327 = arith.mulf %326, %322 : vector<8x64xf32>
    %cst_74 = arith.constant 1.000000e+00 : f32
    %328 = vector.broadcast %cst_74 : f32 to vector<8x1xf32>
    %329 = arith.subf %328, %325 : vector<8x1xf32>
    %330 = vector.broadcast %329 : vector<8x1xf32> to vector<8x64xf32>
    %331 = arith.mulf %330, %291 : vector<8x64xf32>
    %332 = arith.addf %327, %331 : vector<8x64xf32>
    %c8_i32 = arith.constant 8 : i32
    %c0_75 = arith.constant 0 : index
    %c0_76 = arith.constant 0 : index
    %333 = vector.load %arg5[%c0_75, %c0_76] : memref<64x64xf32, #tpu.memory_space<vmem>>, vector<64x64xf32>
    %cst_77 = arith.constant dense<0.000000e+00> : vector<8x64xf32>
    %334 = tpu.matmul %332, %333, %cst_77 {dimension_numbers = #tpu.dot_dimension_numbers<[1], [0], [0], [1], [0, 0, 1, 1], [], []>} : vector<8x64xf32>, vector<64x64xf32>, vector<8x64xf32> -> vector<8x64xf32>
    %c0_78 = arith.constant 0 : index
    %c0_79 = arith.constant 0 : index
    %335 = vector.load %arg6[%c0_78, %c0_79] : memref<1x64xf32, #tpu.memory_space<vmem>>, vector<1x64xf32>
    %336 = vector.broadcast %335 : vector<1x64xf32> to vector<8x64xf32>
    %337 = arith.addf %334, %336 : vector<8x64xf32>
    %c0_80 = arith.constant 0 : index
    %c0_81 = arith.constant 0 : index
    %338 = vector.load %arg7[%c0_80, %c0_81] : memref<8x64xf32, #tpu.memory_space<vmem>>, vector<8x64xf32>
    tpu.vector_store %arg7[%c0_80, %c0_81], %337 {strides = array<i32>} : memref<8x64xf32, #tpu.memory_space<vmem>>, vector<8x64xf32>,
    return
  }
  func.func @transform_0(%arg0: i32) -> (i32, i32, i32) {
    %c0_i32 = arith.constant 0 : i32
    %c0_i32_0 = arith.constant 0 : i32
    %c0_i32_1 = arith.constant 0 : i32
    return %c0_i32, %arg0, %c0_i32_0 : i32, i32, i32
  }
  func.func @transform_1(%arg0: i32) -> (i32, i32, i32) {
    %c0_i32 = arith.constant 0 : i32
    %c0_i32_0 = arith.constant 0 : i32
    %c0_i32_1 = arith.constant 0 : i32
    return %c0_i32, %arg0, %c0_i32_0 : i32, i32, i32
  }
  func.func @transform_2(%arg0: i32) -> (i32, i32) {
    %c0_i32 = arith.constant 0 : i32
    %c0_i32_0 = arith.constant 0 : i32
    %c0_i32_1 = arith.constant 0 : i32
    return %c0_i32, %c0_i32_0 : i32, i32
  }
  func.func @transform_3(%arg0: i32) -> (i32, i32) {
    %c0_i32 = arith.constant 0 : i32
    %c0_i32_0 = arith.constant 0 : i32
    %c0_i32_1 = arith.constant 0 : i32
    return %c0_i32, %c0_i32_0 : i32, i32
  }
  func.func @transform_4(%arg0: i32) -> (i32, i32) {
    %c0_i32 = arith.constant 0 : i32
    %c0_i32_0 = arith.constant 0 : i32
    %c0_i32_1 = arith.constant 0 : i32
    return %c0_i32, %c0_i32_0 : i32, i32
  }
  func.func @transform_5(%arg0: i32) -> (i32, i32) {
    %c0_i32 = arith.constant 0 : i32
    %c0_i32_0 = arith.constant 0 : i32
    %c0_i32_1 = arith.constant 0 : i32
    return %c0_i32, %c0_i32_0 : i32, i32
  }
  func.func @transform_6(%arg0: i32) -> (i32, i32) {
    %c0_i32 = arith.constant 0 : i32
    %c0_i32_0 = arith.constant 0 : i32
    return %arg0, %c0_i32 : i32, i32
  }
}

</mosaic_0001>

<llo_original>
// kernel: tpu_custom_call.1
$region0: #{tpu_custom_call.1}
  #allocation0 [shape = 'u32[]', space=smem, size = 0x4, offset = 0x4, fixed_abs, tag = 'smem constant byte address 0x4 - core index']
  #allocation1 [shape = 'u32[72,128]{1,0:T(1,128)}', space=vmem, size = 0x9000, scoped, tag = 'internal scratch']
  %s0 = inlined_call_operand.hbm [shape: f32[8,8,192], index: 0, kind: input, shape index: {}]
  %s1 = inlined_call_operand.vmem [shape: f32[8,8,1], index: 1, kind: input, shape index: {}]
  %s2 = inlined_call_operand.hbm [shape: f32[64,192], index: 2, kind: input, shape index: {}]
  %s3 = inlined_call_operand.vmem [shape: f32[1,64], index: 3, kind: input, shape index: {}]
  %s4 = inlined_call_operand.vmem [shape: f32[64,64], index: 4, kind: input, shape index: {}]
  %s5 = inlined_call_operand.vmem [shape: f32[1,64], index: 5, kind: input, shape index: {}]
  %s6 = inlined_call_operand.hbm [shape: f32[8,64], index: 6, kind: output, shape index: {}]
  %s7 = sld [smem:[#allocation0]]
  $region42: #{tpu_custom_call.1} parent=0
    _
  %s9 = ssub.s32 1, %s7
  %s10 = scalar_select 0, %s9, %s7
  $region1: #{tpu_custom_call.1} parent=0
    #allocation2 [shape = 'u8[65536]{0}', space=vmem, size = 0x10000, scoped, tag = 'input window, operand 0, single buffered']
    #allocation3 [shape = 's32[1]{0}', space=sflag, size = 0x4, scoped, tag = 'scoped memory for tpu_custom_call.1']
    #allocation4 [shape = 's32[1]{0}', space=sflag, size = 0x4, scoped, tag = 'scoped memory for tpu_custom_call.1']
    #allocation5 [shape = 'u8[65536]{0}', space=vmem, size = 0x10000, scoped, tag = 'input window, operand 2, single buffered']
    #allocation6 [shape = 's32[1]{0}', space=sflag, size = 0x4, scoped, tag = 'scoped memory for tpu_custom_call.1']
    #allocation7 [shape = 'u8[4096]{0}', space=vmem, size = 0x1000, scoped, tag = 'output window, operand 0, single buffered']
    %11 = vsyncpa [#allocation3], 0
    %12 = vsyncpa [#allocation6], 0
    %13 = vsyncpa [#allocation4], 0
    // Predicated region
    $region2: #{tpu_custom_call.1} parent=1 // pred_check
      _
    $region3: #{tpu_custom_call.1} parent=1 // pred_check_branch
      %15 = sbr.rel (0) target = $region5
    $region4: #{tpu_custom_call.1} parent=1 // pred_region
      %17 = vsyncadd [#allocation3], 0
      %s18 = sshll.u32 %s0, 4
      %s19 = int_to_ptr.hbm [resolvable:$true] %s18
      %s20 = sshll.u32 [#allocation2], 4
      %s21 = int_to_ptr.vmem [resolvable:$true] %s20
      %26 = dma.hbm_to_vmem [thread:$0]  %s19, 2048, %s21, [#allocation3], 256, 256, 16
    $region5: #{tpu_custom_call.1} parent=1 // pred_fallthru
      _
    // Predicated region
    $region6: #{tpu_custom_call.1} parent=1 // pred_check
      _
    $region7: #{tpu_custom_call.1} parent=1 // pred_check_branch
      %28 = sbr.rel (0) target = $region9
    $region8: #{tpu_custom_call.1} parent=1 // pred_region
      _
    $region9: #{tpu_custom_call.1} parent=1 // pred_fallthru
      _
    // Predicated region
    $region10: #{tpu_custom_call.1} parent=1 // pred_check
      _
    $region11: #{tpu_custom_call.1} parent=1 // pred_check_branch
      %30 = sbr.rel (0) target = $region13
    $region12: #{tpu_custom_call.1} parent=1 // pred_region
      %32 = vsyncadd [#allocation6], 0
      %s33 = sshll.u32 %s2, 4
      %s34 = int_to_ptr.hbm [resolvable:$true] %s33
      %s35 = sshll.u32 [#allocation5], 4
      %s36 = int_to_ptr.vmem [resolvable:$true] %s35
      %41 = dma.hbm_to_vmem [thread:$0]  %s34, 2048, %s36, [#allocation6], 256, 256, 16
    $region13: #{tpu_custom_call.1} parent=1 // pred_fallthru
      _
    // Predicated region
    $region14: #{tpu_custom_call.1} parent=1 // pred_check
      _
    $region15: #{tpu_custom_call.1} parent=1 // pred_check_branch
      %43 = sbr.rel (0) target = $region17
    $region16: #{tpu_custom_call.1} parent=1 // pred_region
      _
    $region17: #{tpu_custom_call.1} parent=1 // pred_fallthru
      _
    // Predicated region
    $region18: #{tpu_custom_call.1} parent=1 // pred_check
      _
    $region19: #{tpu_custom_call.1} parent=1 // pred_check_branch
      %45 = sbr.rel (0) target = $region21
    $region20: #{tpu_custom_call.1} parent=1 // pred_region
      _
    $region21: #{tpu_custom_call.1} parent=1 // pred_fallthru
      _
    // Predicated region
    $region22: #{tpu_custom_call.1} parent=1 // pred_check
      _
    $region23: #{tpu_custom_call.1} parent=1 // pred_check_branch
      %47 = sbr.rel (0) target = $region25
    $region24: #{tpu_custom_call.1} parent=1 // pred_region
      _
    $region25: #{tpu_custom_call.1} parent=1 // pred_fallthru
      _
    // Predicated region
    $region26: #{tpu_custom_call.1} parent=1 // pred_check
      _
    $region27: #{tpu_custom_call.1} parent=1 // pred_check_branch
      %49 = sbr.rel (0) target = $region29
    $region28: #{tpu_custom_call.1} parent=1 // pred_region
      %51 = dma.done [#allocation3], 2048
    $region29: #{tpu_custom_call.1} parent=1 // pred_fallthru
      _
    // Predicated region
    $region30: #{tpu_custom_call.1} parent=1 // pred_check
      _
    $region31: #{tpu_custom_call.1} parent=1 // pred_check_branch
      %53 = sbr.rel (0) target = $region33
    $region32: #{tpu_custom_call.1} parent=1 // pred_region
      %55 = dma.done [#allocation6], 2048
    $region33: #{tpu_custom_call.1} parent=1 // pred_fallthru
      _
    %v56 = vld [vmem:[#allocation5] sm:$0xff]
    %v57 = vld [vmem:[#allocation5 + $0x8] sm:$0xff]
    %v58 = vld [vmem:[#allocation5 + $0x10] sm:$0xff]
    %v59 = vld [vmem:[#allocation5 + $0x18] sm:$0xff]
    %v60 = vld [vmem:[#allocation5 + $0x20] sm:$0xff]
    %v61 = vld [vmem:[#allocation5 + $0x28] sm:$0xff]
    %v62 = vld [vmem:[#allocation5 + $0x30] sm:$0xff]
    %v63 = vld [vmem:[#allocation5 + $0x38] sm:$0xff]
    %v64 = vld [vmem:[#allocation5 + $0x40] sm:$0xff]
    %v65 = vld [vmem:[#allocation5 + $0x48] sm:$0xff]
    %v66 = vld [vmem:[#allocation5 + $0x50] sm:$0xff]
    %v67 = vld [vmem:[#allocation5 + $0x58] sm:$0xff]
    %v68 = vld [vmem:[#allocation5 + $0x60] sm:$0xff]
    %v69 = vld [vmem:[#allocation5 + $0x68] sm:$0xff]
    %v70 = vld [vmem:[#allocation5 + $0x70] sm:$0xff]
    %v71 = vld [vmem:[#allocation5 + $0x78] sm:$0xff]
    %v72 = vld [vmem:[%s3] sm:$0x1]
    %v74 = vperm.slane %v72, 0
    %v76 = vld [vmem:[#allocation2] sm:$0xff]
    %v77 = vld [vmem:[#allocation2 + $0x8] sm:$0xff]
    %vm78 = vcmask 523264
    %v80 = vsel %vm78, 0.0, 0
    %82 = vmatpush.msra.mxu0 0.0
    %83 = vmatpush.msra.mxu0 0.0
    %84 = vmatpush.msra.mxu0 0.0
    %85 = vmatpush.msra.mxu0 0.0
    %86 = vmatpush.msra.mxu0 0.0
    %87 = vmatpush.msra.mxu0 0.0
    %88 = vmatpush.msra.mxu0 0.0
    %89 = vmatpush.msra.mxu0 0.0
    %90 = vmatpush.msra.mxu0 %v70
    %91 = vmatpush.msra.mxu0 %v68
    %92 = vmatpush.msra.mxu0 %v66
    %93 = vmatpush.msra.mxu0 %v64
    %94 = vmatpush.msra.mxu0 %v62
    %95 = vmatpush.msra.mxu0 %v60
    %96 = vmatpush.msra.mxu0 %v58
    %97 = vmatpush.msra.mxu0 %v56
    %98 = vmatmul.f32.gmra.mxu0 %v80
    %v99 = vpop.f32.mrf.mxu0
    %v100 = vadd.f32 0.0, %v99
    %101 = vdwg.mxu0
    %102 = vmatpush.msra.mxu0 0.0
    %103 = vmatpush.msra.mxu0 0.0
    %104 = vmatpush.msra.mxu0 0.0
    %105 = vmatpush.msra.mxu0 0.0
    %106 = vmatpush.msra.mxu0 0.0
    %107 = vmatpush.msra.mxu0 0.0
    %108 = vmatpush.msra.mxu0 0.0
    %109 = vmatpush.msra.mxu0 0.0
    %110 = vmatpush.msra.mxu0 %v71
    %111 = vmatpush.msra.mxu0 %v69
    %112 = vmatpush.msra.mxu0 %v67
    %113 = vmatpush.msra.mxu0 %v65
    %114 = vmatpush.msra.mxu0 %v63
    %115 = vmatpush.msra.mxu0 %v61
    %116 = vmatpush.msra.mxu0 %v59
    %117 = vmatpush.msra.mxu0 %v57
    %118 = vmatmul.f32.gmra.mxu0 %v80
    %v119 = vpop.f32.mrf.mxu0
    %v120 = vadd.f32 0.0, %v119
    %121 = vdwg.mxu0
    %v122 = vadd.f32 %v76, %v100
    %v123 = vxor.u32 %v122, 2147483648
    %v124 = vmul.f32 %v123, 1.442695
    %v125 = vpow.pop %v124
    %v126 = vadd.f32 %v125, 1.0
    %v127 = vrcp.pop %v126
    %v128 = vmul.f32 %v126, %v127
    %v129 = vsub.f32 1.0, %v128
    %v130 = vmul.f32 %v127, %v129
    %v131 = vadd.f32 %v127, %v130
    %vm132 = vweird.f32 %v126
    %vm133 = vweird.f32 %v127
    %vm134 = vmor %vm132, %vm133
    %v135 = vsel %vm134, %v127, %v131
    %v136 = vand.u32 2147483647, %v126
    %vm137 = vcmp.eq.f32.partialorder %v136, 8.507059e+37
    %v138 = vand.u32 %v126, 2147483648
    %v139 = vor.u32 1.1754944e-38, %v138
    %v140 = vsel %vm137, %v139, %v135
    %v141 = vmul.f32 1.0, %v140
    %v142 = vadd.f32 %v120, %v74
    %v143 = vmul.f32 %v141, %v142
    %v144 = vadd.f32 %v77, %v143
    %v145 = vtanh.pop %v144
    %v146 = vsub.f32 1.0, %v141
    %148 = vrot.lane.b32.xlu0 %v145, 64
    %v149 = vpop.permute.xlu0 %148
    %v151 = vmul.f32 %v146, %v149
    %v152 = vmul.f32 %v141, 0.0
    %v153 = vadd.f32 %v151, %v152
    %v154 = vld [vmem:[%s1] sm:$0xff]
    %156 = vset.pattern.permute.xlu0 0
    %157 = vperm.xlu0 %156, %v154
    %v158 = vpop.permute.xlu0 %157
    %v160 = vmul.f32 %v158, %v153
    %v161 = vsub.f32 1.0, %v154
    %163 = vset.pattern.permute.xlu0 0
    %164 = vperm.xlu0 %163, %v161
    %v165 = vpop.permute.xlu0 %164
    %v167 = vmul.f32 %v165, 0.0
    %v168 = vadd.f32 %v160, %v167
    %s169 = scalar_lea.vmem [#allocation2], 16
    %v170 = vld [vmem:[%s169] sm:$0xff]
    %v171 = vld [vmem:[%s169 + $0x8] sm:$0xff]
    %173 = vrot.lane.b32.xlu0 %v168, 64
    %v174 = vpop.permute.xlu0 %173
    %v175 = vsel %vm78, %v174, 0
    %177 = vmatpush.msra.mxu0 0.0
    %178 = vmatpush.msra.mxu0 0.0
    %179 = vmatpush.msra.mxu0 0.0
    %180 = vmatpush.msra.mxu0 0.0
    %181 = vmatpush.msra.mxu0 0.0
    %182 = vmatpush.msra.mxu0 0.0
    %183 = vmatpush.msra.mxu0 0.0
    %184 = vmatpush.msra.mxu0 0.0
    %185 = vmatpush.msra.mxu0 %v70
    %186 = vmatpush.msra.mxu0 %v68
    %187 = vmatpush.msra.mxu0 %v66
    %188 = vmatpush.msra.mxu0 %v64
    %189 = vmatpush.msra.mxu0 %v62
    %190 = vmatpush.msra.mxu0 %v60
    %191 = vmatpush.msra.mxu0 %v58
    %192 = vmatpush.msra.mxu0 %v56
    %193 = vmatmul.f32.gmra.mxu0 %v175
    %v194 = vpop.f32.mrf.mxu0
    %v195 = vadd.f32 0.0, %v194
    %196 = vdwg.mxu0
    %197 = vmatpush.msra.mxu0 0.0
    %198 = vmatpush.msra.mxu0 0.0
    %199 = vmatpush.msra.mxu0 0.0
    %200 = vmatpush.msra.mxu0 0.0
    %201 = vmatpush.msra.mxu0 0.0
    %202 = vmatpush.msra.mxu0 0.0
    %203 = vmatpush.msra.mxu0 0.0
    %204 = vmatpush.msra.mxu0 0.0
    %205 = vmatpush.msra.mxu0 %v71
    %206 = vmatpush.msra.mxu0 %v69
    %207 = vmatpush.msra.mxu0 %v67
    %208 = vmatpush.msra.mxu0 %v65
    %209 = vmatpush.msra.mxu0 %v63
    %210 = vmatpush.msra.mxu0 %v61
    %211 = vmatpush.msra.mxu0 %v59
    %212 = vmatpush.msra.mxu0 %v57
    %213 = vmatmul.f32.gmra.mxu0 %v175
    %v214 = vpop.f32.mrf.mxu0
    %v215 = vadd.f32 0.0, %v214
    %216 = vdwg.mxu0
    %v217 = vadd.f32 %v170, %v195
    %v218 = vxor.u32 %v217, 2147483648
    %v219 = vmul.f32 %v218, 1.442695
    %v220 = vpow.pop %v219
    %v221 = vadd.f32 %v220, 1.0
    %v222 = vrcp.pop %v221
    %v223 = vmul.f32 %v221, %v222
    %v224 = vsub.f32 1.0, %v223
    %v225 = vmul.f32 %v222, %v224
    %v226 = vadd.f32 %v222, %v225
    %vm227 = vweird.f32 %v221
    %vm228 = vweird.f32 %v222
    %vm229 = vmor %vm227, %vm228
    %v230 = vsel %vm229, %v222, %v226
    %v231 = vand.u32 2147483647, %v221
    %vm232 = vcmp.eq.f32.partialorder %v231, 8.507059e+37
    %v233 = vand.u32 %v221, 2147483648
    %v234 = vor.u32 1.1754944e-38, %v233
    %v235 = vsel %vm232, %v234, %v230
    %v236 = vmul.f32 1.0, %v235
    %v237 = vadd.f32 %v215, %v74
    %v238 = vmul.f32 %v236, %v237
    %v239 = vadd.f32 %v171, %v238
    %v240 = vtanh.pop %v239
    %v241 = vsub.f32 1.0, %v236
    %243 = vrot.lane.b32.xlu0 %v240, 64
    %v244 = vpop.permute.xlu0 %243
    %v246 = vmul.f32 %v241, %v244
    %v247 = vmul.f32 %v236, %v168
    %v248 = vadd.f32 %v246, %v247
    %s249 = scalar_lea.vmem %s1, 8
    %v250 = vld [vmem:[%s249] sm:$0xff]
    %252 = vset.pattern.permute.xlu0 0
    %253 = vperm.xlu0 %252, %v250
    %v254 = vpop.permute.xlu0 %253
    %v256 = vmul.f32 %v254, %v248
    %v257 = vsub.f32 1.0, %v250
    %259 = vset.pattern.permute.xlu0 0
    %260 = vperm.xlu0 %259, %v257
    %v261 = vpop.permute.xlu0 %260
    %v263 = vmul.f32 %v261, %v168
    %v264 = vadd.f32 %v256, %v263
    %s265 = scalar_lea.vmem [#allocation2], 32
    %v266 = vld [vmem:[%s265] sm:$0xff]
    %v267 = vld [vmem:[%s265 + $0x8] sm:$0xff]
    %269 = vrot.lane.b32.xlu0 %v264, 64
    %v270 = vpop.permute.xlu0 %269
    %v271 = vsel %vm78, %v270, 0
    %273 = vmatpush.msra.mxu0 0.0
    %274 = vmatpush.msra.mxu0 0.0
    %275 = vmatpush.msra.mxu0 0.0
    %276 = vmatpush.msra.mxu0 0.0
    %277 = vmatpush.msra.mxu0 0.0
    %278 = vmatpush.msra.mxu0 0.0
    %279 = vmatpush.msra.mxu0 0.0
    %280 = vmatpush.msra.mxu0 0.0
    %281 = vmatpush.msra.mxu0 %v70
    %282 = vmatpush.msra.mxu0 %v68
    %283 = vmatpush.msra.mxu0 %v66
    %284 = vmatpush.msra.mxu0 %v64
    %285 = vmatpush.msra.mxu0 %v62
    %286 = vmatpush.msra.mxu0 %v60
    %287 = vmatpush.msra.mxu0 %v58
    %288 = vmatpush.msra.mxu0 %v56
    %289 = vmatmul.f32.gmra.mxu0 %v271
    %v290 = vpop.f32.mrf.mxu0
    %v291 = vadd.f32 0.0, %v290
    %292 = vdwg.mxu0
    %293 = vmatpush.msra.mxu0 0.0
    %294 = vmatpush.msra.mxu0 0.0
    %295 = vmatpush.msra.mxu0 0.0
    %296 = vmatpush.msra.mxu0 0.0
    %297 = vmatpush.msra.mxu0 0.0
    %298 = vmatpush.msra.mxu0 0.0
    %299 = vmatpush.msra.mxu0 0.0
    %300 = vmatpush.msra.mxu0 0.0
    %301 = vmatpush.msra.mxu0 %v71
    %302 = vmatpush.msra.mxu0 %v69
    %303 = vmatpush.msra.mxu0 %v67
    %304 = vmatpush.msra.mxu0 %v65
    %305 = vmatpush.msra.mxu0 %v63
    %306 = vmatpush.msra.mxu0 %v61
    %307 = vmatpush.msra.mxu0 %v59
    %308 = vmatpush.msra.mxu0 %v57
    %309 = vmatmul.f32.gmra.mxu0 %v271
    %v310 = vpop.f32.mrf.mxu0
    %v311 = vadd.f32 0.0, %v310
    %312 = vdwg.mxu0
    %v313 = vadd.f32 %v266, %v291
    %v314 = vxor.u32 %v313, 2147483648
    %v315 = vmul.f32 %v314, 1.442695
    %v316 = vpow.pop %v315
    %v317 = vadd.f32 %v316, 1.0
    %v318 = vrcp.pop %v317
    %v319 = vmul.f32 %v317, %v318
    %v320 = vsub.f32 1.0, %v319
    %v321 = vmul.f32 %v318, %v320
    %v322 = vadd.f32 %v318, %v321
    %vm323 = vweird.f32 %v317
    %vm324 = vweird.f32 %v318
    %vm325 = vmor %vm323, %vm324
    %v326 = vsel %vm325, %v318, %v322
    %v327 = vand.u32 2147483647, %v317
    %vm328 = vcmp.eq.f32.partialorder %v327, 8.507059e+37
    %v329 = vand.u32 %v317, 2147483648
    %v330 = vor.u32 1.1754944e-38, %v329
    %v331 = vsel %vm328, %v330, %v326
    %v332 = vmul.f32 1.0, %v331
    %v333 = vadd.f32 %v311, %v74
    %v334 = vmul.f32 %v332, %v333
    %v335 = vadd.f32 %v267, %v334
    %v336 = vtanh.pop %v335
    %v337 = vsub.f32 1.0, %v332
    %339 = vrot.lane.b32.xlu0 %v336, 64
    %v340 = vpop.permute.xlu0 %339
    %v342 = vmul.f32 %v337, %v340
    %v343 = vmul.f32 %v332, %v264
    %v344 = vadd.f32 %v342, %v343
    %s345 = scalar_lea.vmem %s1, 16
    %v346 = vld [vmem:[%s345] sm:$0xff]
    %348 = vset.pattern.permute.xlu0 0
    %349 = vperm.xlu0 %348, %v346
    %v350 = vpop.permute.xlu0 %349
    %v352 = vmul.f32 %v350, %v344
    %v353 = vsub.f32 1.0, %v346
    %355 = vset.pattern.permute.xlu0 0
    %356 = vperm.xlu0 %355, %v353
    %v357 = vpop.permute.xlu0 %356
    %v359 = vmul.f32 %v357, %v264
    %v360 = vadd.f32 %v352, %v359
    %s361 = scalar_lea.vmem [#allocation2], 48
    %v362 = vld [vmem:[%s361] sm:$0xff]
    %v363 = vld [vmem:[%s361 + $0x8] sm:$0xff]
    %365 = vrot.lane.b32.xlu0 %v360, 64
    %v366 = vpop.permute.xlu0 %365
    %v367 = vsel %vm78, %v366, 0
    %369 = vmatpush.msra.mxu0 0.0
    %370 = vmatpush.msra.mxu0 0.0
    %371 = vmatpush.msra.mxu0 0.0
    %372 = vmatpush.msra.mxu0 0.0
    %373 = vmatpush.msra.mxu0 0.0
    %374 = vmatpush.msra.mxu0 0.0
    %375 = vmatpush.msra.mxu0 0.0
    %376 = vmatpush.msra.mxu0 0.0
    %377 = vmatpush.msra.mxu0 %v70
    %378 = vmatpush.msra.mxu0 %v68
    %379 = vmatpush.msra.mxu0 %v66
    %380 = vmatpush.msra.mxu0 %v64
    %381 = vmatpush.msra.mxu0 %v62
    %382 = vmatpush.msra.mxu0 %v60
    %383 = vmatpush.msra.mxu0 %v58
    %384 = vmatpush.msra.mxu0 %v56
    %385 = vmatmul.f32.gmra.mxu0 %v367
    %v386 = vpop.f32.mrf.mxu0
    %v387 = vadd.f32 0.0, %v386
    %388 = vdwg.mxu0
    %389 = vmatpush.msra.mxu0 0.0
    %390 = vmatpush.msra.mxu0 0.0
    %391 = vmatpush.msra.mxu0 0.0
    %392 = vmatpush.msra.mxu0 0.0
    %393 = vmatpush.msra.mxu0 0.0
    %394 = vmatpush.msra.mxu0 0.0
    %395 = vmatpush.msra.mxu0 0.0
    %396 = vmatpush.msra.mxu0 0.0
    %397 = vmatpush.msra.mxu0 %v71
    %398 = vmatpush.msra.mxu0 %v69
    %399 = vmatpush.msra.mxu0 %v67
    %400 = vmatpush.msra.mxu0 %v65
    %401 = vmatpush.msra.mxu0 %v63
    %402 = vmatpush.msra.mxu0 %v61
    %403 = vmatpush.msra.mxu0 %v59
    %404 = vmatpush.msra.mxu0 %v57
    %405 = vmatmul.f32.gmra.mxu0 %v367
    %v406 = vpop.f32.mrf.mxu0
    %v407 = vadd.f32 0.0, %v406
    %408 = vdwg.mxu0
    %v409 = vadd.f32 %v362, %v387
    %v410 = vxor.u32 %v409, 2147483648
    %v411 = vmul.f32 %v410, 1.442695
    %v412 = vpow.pop %v411
    %v413 = vadd.f32 %v412, 1.0
    %v414 = vrcp.pop %v413
    %v415 = vmul.f32 %v413, %v414
    %v416 = vsub.f32 1.0, %v415
    %v417 = vmul.f32 %v414, %v416
    %v418 = vadd.f32 %v414, %v417
    %vm419 = vweird.f32 %v413
    %vm420 = vweird.f32 %v414
    %vm421 = vmor %vm419, %vm420
    %v422 = vsel %vm421, %v414, %v418
    %v423 = vand.u32 2147483647, %v413
    %vm424 = vcmp.eq.f32.partialorder %v423, 8.507059e+37
    %v425 = vand.u32 %v413, 2147483648
    %v426 = vor.u32 1.1754944e-38, %v425
    %v427 = vsel %vm424, %v426, %v422
    %v428 = vmul.f32 1.0, %v427
    %v429 = vadd.f32 %v407, %v74
    %v430 = vmul.f32 %v428, %v429
    %v431 = vadd.f32 %v363, %v430
    %v432 = vtanh.pop %v431
    %v433 = vsub.f32 1.0, %v428
    %435 = vrot.lane.b32.xlu0 %v432, 64
    %v436 = vpop.permute.xlu0 %435
    %v438 = vmul.f32 %v433, %v436
    %v439 = vmul.f32 %v428, %v360
    %v440 = vadd.f32 %v438, %v439
    %s441 = scalar_lea.vmem %s1, 24
    %v442 = vld [vmem:[%s441] sm:$0xff]
    %444 = vset.pattern.permute.xlu0 0
    %445 = vperm.xlu0 %444, %v442
    %v446 = vpop.permute.xlu0 %445
    %v448 = vmul.f32 %v446, %v440
    %v449 = vsub.f32 1.0, %v442
    %451 = vset.pattern.permute.xlu0 0
    %452 = vperm.xlu0 %451, %v449
    %v453 = vpop.permute.xlu0 %452
    %v455 = vmul.f32 %v453, %v360
    %v456 = vadd.f32 %v448, %v455
    %s457 = scalar_lea.vmem [#allocation2], 64
    %v458 = vld [vmem:[%s457] sm:$0xff]
    %v459 = vld [vmem:[%s457 + $0x8] sm:$0xff]
    %461 = vrot.lane.b32.xlu0 %v456, 64
    %v462 = vpop.permute.xlu0 %461
    %v463 = vsel %vm78, %v462, 0
    %465 = vmatpush.msra.mxu0 0.0
    %466 = vmatpush.msra.mxu0 0.0
    %467 = vmatpush.msra.mxu0 0.0
    %468 = vmatpush.msra.mxu0 0.0
    %469 = vmatpush.msra.mxu0 0.0
    %470 = vmatpush.msra.mxu0 0.0
    %471 = vmatpush.msra.mxu0 0.0
    %472 = vmatpush.msra.mxu0 0.0
    %473 = vmatpush.msra.mxu0 %v70
    %474 = vmatpush.msra.mxu0 %v68
    %475 = vmatpush.msra.mxu0 %v66
    %476 = vmatpush.msra.mxu0 %v64
    %477 = vmatpush.msra.mxu0 %v62
    %478 = vmatpush.msra.mxu0 %v60
    %479 = vmatpush.msra.mxu0 %v58
    %480 = vmatpush.msra.mxu0 %v56
    %481 = vmatmul.f32.gmra.mxu0 %v463
    %v482 = vpop.f32.mrf.mxu0
    %v483 = vadd.f32 0.0, %v482
    %484 = vdwg.mxu0
    %485 = vmatpush.msra.mxu0 0.0
    %486 = vmatpush.msra.mxu0 0.0
    %487 = vmatpush.msra.mxu0 0.0
    %488 = vmatpush.msra.mxu0 0.0
    %489 = vmatpush.msra.mxu0 0.0
    %490 = vmatpush.msra.mxu0 0.0
    %491 = vmatpush.msra.mxu0 0.0
    %492 = vmatpush.msra.mxu0 0.0
    %493 = vmatpush.msra.mxu0 %v71
    %494 = vmatpush.msra.mxu0 %v69
    %495 = vmatpush.msra.mxu0 %v67
    %496 = vmatpush.msra.mxu0 %v65
    %497 = vmatpush.msra.mxu0 %v63
    %498 = vmatpush.msra.mxu0 %v61
    %499 = vmatpush.msra.mxu0 %v59
    %500 = vmatpush.msra.mxu0 %v57
    %501 = vmatmul.f32.gmra.mxu0 %v463
    %v502 = vpop.f32.mrf.mxu0
    %v503 = vadd.f32 0.0, %v502
    %504 = vdwg.mxu0
    %v505 = vadd.f32 %v458, %v483
    %v506 = vxor.u32 %v505, 2147483648
    %v507 = vmul.f32 %v506, 1.442695
    %v508 = vpow.pop %v507
    %v509 = vadd.f32 %v508, 1.0
    %v510 = vrcp.pop %v509
    %v511 = vmul.f32 %v509, %v510
    %v512 = vsub.f32 1.0, %v511
    %v513 = vmul.f32 %v510, %v512
    %v514 = vadd.f32 %v510, %v513
    %vm515 = vweird.f32 %v509
    %vm516 = vweird.f32 %v510
    %vm517 = vmor %vm515, %vm516
    %v518 = vsel %vm517, %v510, %v514
    %v519 = vand.u32 2147483647, %v509
    %vm520 = vcmp.eq.f32.partialorder %v519, 8.507059e+37
    %v521 = vand.u32 %v509, 2147483648
    %v522 = vor.u32 1.1754944e-38, %v521
    %v523 = vsel %vm520, %v522, %v518
    %v524 = vmul.f32 1.0, %v523
    %v525 = vadd.f32 %v503, %v74
    %v526 = vmul.f32 %v524, %v525
    %v527 = vadd.f32 %v459, %v526
    %v528 = vtanh.pop %v527
    %v529 = vsub.f32 1.0, %v524
    %531 = vrot.lane.b32.xlu0 %v528, 64
    %v532 = vpop.permute.xlu0 %531
    %v534 = vmul.f32 %v529, %v532
    %v535 = vmul.f32 %v524, %v456
    %v536 = vadd.f32 %v534, %v535
    %s537 = scalar_lea.vmem %s1, 32
    %v538 = vld [vmem:[%s537] sm:$0xff]
    %540 = vset.pattern.permute.xlu0 0
    %541 = vperm.xlu0 %540, %v538
    %v542 = vpop.permute.xlu0 %541
    %v544 = vmul.f32 %v542, %v536
    %v545 = vsub.f32 1.0, %v538
    %547 = vset.pattern.permute.xlu0 0
    %548 = vperm.xlu0 %547, %v545
    %v549 = vpop.permute.xlu0 %548
    %v551 = vmul.f32 %v549, %v456
    %v552 = vadd.f32 %v544, %v551
    %s553 = scalar_lea.vmem [#allocation2], 80
    %v554 = vld [vmem:[%s553] sm:$0xff]
    %v555 = vld [vmem:[%s553 + $0x8] sm:$0xff]
    %557 = vrot.lane.b32.xlu0 %v552, 64
    %v558 = vpop.permute.xlu0 %557
    %v559 = vsel %vm78, %v558, 0
    %561 = vmatpush.msra.mxu0 0.0
    %562 = vmatpush.msra.mxu0 0.0
    %563 = vmatpush.msra.mxu0 0.0
    %564 = vmatpush.msra.mxu0 0.0
    %565 = vmatpush.msra.mxu0 0.0
    %566 = vmatpush.msra.mxu0 0.0
    %567 = vmatpush.msra.mxu0 0.0
    %568 = vmatpush.msra.mxu0 0.0
    %569 = vmatpush.msra.mxu0 %v70
    %570 = vmatpush.msra.mxu0 %v68
    %571 = vmatpush.msra.mxu0 %v66
    %572 = vmatpush.msra.mxu0 %v64
    %573 = vmatpush.msra.mxu0 %v62
    %574 = vmatpush.msra.mxu0 %v60
    %575 = vmatpush.msra.mxu0 %v58
    %576 = vmatpush.msra.mxu0 %v56
    %577 = vmatmul.f32.gmra.mxu0 %v559
    %v578 = vpop.f32.mrf.mxu0
    %v579 = vadd.f32 0.0, %v578
    %580 = vdwg.mxu0
    %581 = vmatpush.msra.mxu0 0.0
    %582 = vmatpush.msra.mxu0 0.0
    %583 = vmatpush.msra.mxu0 0.0
    %584 = vmatpush.msra.mxu0 0.0
    %585 = vmatpush.msra.mxu0 0.0
    %586 = vmatpush.msra.mxu0 0.0
    %587 = vmatpush.msra.mxu0 0.0
    %588 = vmatpush.msra.mxu0 0.0
    %589 = vmatpush.msra.mxu0 %v71
    %590 = vmatpush.msra.mxu0 %v69
    %591 = vmatpush.msra.mxu0 %v67
    %592 = vmatpush.msra.mxu0 %v65
    %593 = vmatpush.msra.mxu0 %v63
    %594 = vmatpush.msra.mxu0 %v61
    %595 = vmatpush.msra.mxu0 %v59
    %596 = vmatpush.msra.mxu0 %v57
    %597 = vmatmul.f32.gmra.mxu0 %v559
    %v598 = vpop.f32.mrf.mxu0
    %v599 = vadd.f32 0.0, %v598
    %600 = vdwg.mxu0
    %v601 = vadd.f32 %v554, %v579
    %v602 = vxor.u32 %v601, 2147483648
    %v603 = vmul.f32 %v602, 1.442695
    %v604 = vpow.pop %v603
    %v605 = vadd.f32 %v604, 1.0
    %v606 = vrcp.pop %v605
    %v607 = vmul.f32 %v605, %v606
    %v608 = vsub.f32 1.0, %v607
    %v609 = vmul.f32 %v606, %v608
    %v610 = vadd.f32 %v606, %v609
    %vm611 = vweird.f32 %v605
    %vm612 = vweird.f32 %v606
    %vm613 = vmor %vm611, %vm612
    %v614 = vsel %vm613, %v606, %v610
    %v615 = vand.u32 2147483647, %v605
    %vm616 = vcmp.eq.f32.partialorder %v615, 8.507059e+37
    %v617 = vand.u32 %v605, 2147483648
    %v618 = vor.u32 1.1754944e-38, %v617
    %v619 = vsel %vm616, %v618, %v614
    %v620 = vmul.f32 1.0, %v619
    %v621 = vadd.f32 %v599, %v74
    %v622 = vmul.f32 %v620, %v621
    %v623 = vadd.f32 %v555, %v622
    %v624 = vtanh.pop %v623
    %v625 = vsub.f32 1.0, %v620
    %627 = vrot.lane.b32.xlu0 %v624, 64
    %v628 = vpop.permute.xlu0 %627
    %v630 = vmul.f32 %v625, %v628
    %v631 = vmul.f32 %v620, %v552
    %v632 = vadd.f32 %v630, %v631
    %s633 = scalar_lea.vmem %s1, 40
    %v634 = vld [vmem:[%s633] sm:$0xff]
    %636 = vset.pattern.permute.xlu0 0
    %637 = vperm.xlu0 %636, %v634
    %v638 = vpop.permute.xlu0 %637
    %v640 = vmul.f32 %v638, %v632
    %v641 = vsub.f32 1.0, %v634
    %643 = vset.pattern.permute.xlu0 0
    %644 = vperm.xlu0 %643, %v641
    %v645 = vpop.permute.xlu0 %644
    %v647 = vmul.f32 %v645, %v552
    %v648 = vadd.f32 %v640, %v647
    %s649 = scalar_lea.vmem [#allocation2], 96
    %v650 = vld [vmem:[%s649] sm:$0xff]
    %v651 = vld [vmem:[%s649 + $0x8] sm:$0xff]
    %653 = vrot.lane.b32.xlu0 %v648, 64
    %v654 = vpop.permute.xlu0 %653
    %v655 = vsel %vm78, %v654, 0
    %657 = vmatpush.msra.mxu0 0.0
    %658 = vmatpush.msra.mxu0 0.0
    %659 = vmatpush.msra.mxu0 0.0
    %660 = vmatpush.msra.mxu0 0.0
    %661 = vmatpush.msra.mxu0 0.0
    %662 = vmatpush.msra.mxu0 0.0
    %663 = vmatpush.msra.mxu0 0.0
    %664 = vmatpush.msra.mxu0 0.0
    %665 = vmatpush.msra.mxu0 %v70
    %666 = vmatpush.msra.mxu0 %v68
    %667 = vmatpush.msra.mxu0 %v66
    %668 = vmatpush.msra.mxu0 %v64
    %669 = vmatpush.msra.mxu0 %v62
    %670 = vmatpush.msra.mxu0 %v60
    %671 = vmatpush.msra.mxu0 %v58
    %672 = vmatpush.msra.mxu0 %v56
    %673 = vmatmul.f32.gmra.mxu0 %v655
    %v674 = vpop.f32.mrf.mxu0
    %v675 = vadd.f32 0.0, %v674
    %676 = vdwg.mxu0
    %677 = vmatpush.msra.mxu0 0.0
    %678 = vmatpush.msra.mxu0 0.0
    %679 = vmatpush.msra.mxu0 0.0
    %680 = vmatpush.msra.mxu0 0.0
    %681 = vmatpush.msra.mxu0 0.0
    %682 = vmatpush.msra.mxu0 0.0
    %683 = vmatpush.msra.mxu0 0.0
    %684 = vmatpush.msra.mxu0 0.0
    %685 = vmatpush.msra.mxu0 %v71
    %686 = vmatpush.msra.mxu0 %v69
    %687 = vmatpush.msra.mxu0 %v67
    %688 = vmatpush.msra.mxu0 %v65
    %689 = vmatpush.msra.mxu0 %v63
    %690 = vmatpush.msra.mxu0 %v61
    %691 = vmatpush.msra.mxu0 %v59
    %692 = vmatpush.msra.mxu0 %v57
    %693 = vmatmul.f32.gmra.mxu0 %v655
    %v694 = vpop.f32.mrf.mxu0
    %v695 = vadd.f32 0.0, %v694
    %696 = vdwg.mxu0
    %v697 = vadd.f32 %v650, %v675
    %v698 = vxor.u32 %v697, 2147483648
    %v699 = vmul.f32 %v698, 1.442695
    %v700 = vpow.pop %v699
    %v701 = vadd.f32 %v700, 1.0
    %v702 = vrcp.pop %v701
    %v703 = vmul.f32 %v701, %v702
    %v704 = vsub.f32 1.0, %v703
    %v705 = vmul.f32 %v702, %v704
    %v706 = vadd.f32 %v702, %v705
    %vm707 = vweird.f32 %v701
    %vm708 = vweird.f32 %v702
    %vm709 = vmor %vm707, %vm708
    %v710 = vsel %vm709, %v702, %v706
    %v711 = vand.u32 2147483647, %v701
    %vm712 = vcmp.eq.f32.partialorder %v711, 8.507059e+37
    %v713 = vand.u32 %v701, 2147483648
    %v714 = vor.u32 1.1754944e-38, %v713
    %v715 = vsel %vm712, %v714, %v710
    %v716 = vmul.f32 1.0, %v715
    %v717 = vadd.f32 %v695, %v74
    %v718 = vmul.f32 %v716, %v717
    %v719 = vadd.f32 %v651, %v718
    %v720 = vtanh.pop %v719
    %v721 = vsub.f32 1.0, %v716
    %723 = vrot.lane.b32.xlu0 %v720, 64
    %v724 = vpop.permute.xlu0 %723
    %v726 = vmul.f32 %v721, %v724
    %v727 = vmul.f32 %v716, %v648
    %v728 = vadd.f32 %v726, %v727
    %s729 = scalar_lea.vmem %s1, 48
    %v730 = vld [vmem:[%s729] sm:$0xff]
    %732 = vset.pattern.permute.xlu0 0
    %733 = vperm.xlu0 %732, %v730
    %v734 = vpop.permute.xlu0 %733
    %v736 = vmul.f32 %v734, %v728
    %v737 = vsub.f32 1.0, %v730
    %739 = vset.pattern.permute.xlu0 0
    %740 = vperm.xlu0 %739, %v737
    %v741 = vpop.permute.xlu0 %740
    %v743 = vmul.f32 %v741, %v648
    %v744 = vadd.f32 %v736, %v743
    %s745 = scalar_lea.vmem [#allocation2], 112
    %v746 = vld [vmem:[%s745] sm:$0xff]
    %v747 = vld [vmem:[%s745 + $0x8] sm:$0xff]
    %749 = vrot.lane.b32.xlu0 %v744, 64
    %v750 = vpop.permute.xlu0 %749
    %v751 = vsel %vm78, %v750, 0
    %753 = vmatpush.msra.mxu0 0.0
    %754 = vmatpush.msra.mxu0 0.0
    %755 = vmatpush.msra.mxu0 0.0
    %756 = vmatpush.msra.mxu0 0.0
    %757 = vmatpush.msra.mxu0 0.0
    %758 = vmatpush.msra.mxu0 0.0
    %759 = vmatpush.msra.mxu0 0.0
    %760 = vmatpush.msra.mxu0 0.0
    %761 = vmatpush.msra.mxu0 %v70
    %762 = vmatpush.msra.mxu0 %v68
    %763 = vmatpush.msra.mxu0 %v66
    %764 = vmatpush.msra.mxu0 %v64
    %765 = vmatpush.msra.mxu0 %v62
    %766 = vmatpush.msra.mxu0 %v60
    %767 = vmatpush.msra.mxu0 %v58
    %768 = vmatpush.msra.mxu0 %v56
    %769 = vmatmul.f32.gmra.mxu0 %v751
    %v770 = vpop.f32.mrf.mxu0
    %v771 = vadd.f32 0.0, %v770
    %772 = vdwg.mxu0
    %773 = vmatpush.msra.mxu0 0.0
    %774 = vmatpush.msra.mxu0 0.0
    %775 = vmatpush.msra.mxu0 0.0
    %776 = vmatpush.msra.mxu0 0.0
    %777 = vmatpush.msra.mxu0 0.0
    %778 = vmatpush.msra.mxu0 0.0
    %779 = vmatpush.msra.mxu0 0.0
    %780 = vmatpush.msra.mxu0 0.0
    %781 = vmatpush.msra.mxu0 %v71
    %782 = vmatpush.msra.mxu0 %v69
    %783 = vmatpush.msra.mxu0 %v67
    %784 = vmatpush.msra.mxu0 %v65
    %785 = vmatpush.msra.mxu0 %v63
    %786 = vmatpush.msra.mxu0 %v61
    %787 = vmatpush.msra.mxu0 %v59
    %788 = vmatpush.msra.mxu0 %v57
    %789 = vmatmul.f32.gmra.mxu0 %v751
    %v790 = vpop.f32.mrf.mxu0
    %v791 = vadd.f32 0.0, %v790
    %792 = vdwg.mxu0
    %v793 = vadd.f32 %v746, %v771
    %v794 = vxor.u32 %v793, 2147483648
    %v795 = vmul.f32 %v794, 1.442695
    %v796 = vpow.pop %v795
    %v797 = vadd.f32 %v796, 1.0
    %v798 = vrcp.pop %v797
    %v799 = vmul.f32 %v797, %v798
    %v800 = vsub.f32 1.0, %v799
    %v801 = vmul.f32 %v798, %v800
    %v802 = vadd.f32 %v798, %v801
    %vm803 = vweird.f32 %v797
    %vm804 = vweird.f32 %v798
    %vm805 = vmor %vm803, %vm804
    %v806 = vsel %vm805, %v798, %v802
    %v807 = vand.u32 2147483647, %v797
    %vm808 = vcmp.eq.f32.partialorder %v807, 8.507059e+37
    %v809 = vand.u32 %v797, 2147483648
    %v810 = vor.u32 1.1754944e-38, %v809
    %v811 = vsel %vm808, %v810, %v806
    %v812 = vmul.f32 1.0, %v811
    %v813 = vadd.f32 %v791, %v74
    %v814 = vmul.f32 %v812, %v813
    %v815 = vadd.f32 %v747, %v814
    %v816 = vtanh.pop %v815
    %v817 = vsub.f32 1.0, %v812
    %819 = vrot.lane.b32.xlu0 %v816, 64
    %v820 = vpop.permute.xlu0 %819
    %v822 = vmul.f32 %v817, %v820
    %v823 = vmul.f32 %v812, %v744
    %v824 = vadd.f32 %v822, %v823
    %s825 = scalar_lea.vmem %s1, 56
    %v826 = vld [vmem:[%s825] sm:$0xff]
    %828 = vset.pattern.permute.xlu0 0
    %829 = vperm.xlu0 %828, %v826
    %v830 = vpop.permute.xlu0 %829
    %v832 = vmul.f32 %v830, %v824
    %v833 = vsub.f32 1.0, %v826
    %835 = vset.pattern.permute.xlu0 0
    %836 = vperm.xlu0 %835, %v833
    %v837 = vpop.permute.xlu0 %836
    %v839 = vmul.f32 %v837, %v744
    %v840 = vadd.f32 %v832, %v839
    %v841 = vld [vmem:[%s4] sm:$0xff]
    %v842 = vld [vmem:[%s4 + $0x8] sm:$0xff]
    %v843 = vld [vmem:[%s4 + $0x10] sm:$0xff]
    %v844 = vld [vmem:[%s4 + $0x18] sm:$0xff]
    %v845 = vld [vmem:[%s4 + $0x20] sm:$0xff]
    %v846 = vld [vmem:[%s4 + $0x28] sm:$0xff]
    %v847 = vld [vmem:[%s4 + $0x30] sm:$0xff]
    %v848 = vld [vmem:[%s4 + $0x38] sm:$0xff]
    %v849 = vld [vmem:[%s5] sm:$0x1]
    %v851 = vperm.slane %v849, 0
    %854 = vrot.lane.b32.xlu0 %v840, 64
    %v855 = vpop.permute.xlu0 %854
    %v856 = vsel %vm78, %v855, 0
    %858 = vmatpush.msra.mxu0 0.0
    %859 = vmatpush.msra.mxu0 0.0
    %860 = vmatpush.msra.mxu0 0.0
    %861 = vmatpush.msra.mxu0 0.0
    %862 = vmatpush.msra.mxu0 0.0
    %863 = vmatpush.msra.mxu0 0.0
    %864 = vmatpush.msra.mxu0 0.0
    %865 = vmatpush.msra.mxu0 0.0
    %866 = vmatpush.msra.mxu0 %v848
    %867 = vmatpush.msra.mxu0 %v847
    %868 = vmatpush.msra.mxu0 %v846
    %869 = vmatpush.msra.mxu0 %v845
    %870 = vmatpush.msra.mxu0 %v844
    %871 = vmatpush.msra.mxu0 %v843
    %872 = vmatpush.msra.mxu0 %v842
    %873 = vmatpush.msra.mxu0 %v841
    %874 = vmatmul.f32.gmra.mxu0 %v856
    %v875 = vpop.f32.mrf.mxu0
    %v876 = vadd.f32 %v851, %v875
    %877 = vdwg.mxu0
    %878 = vst.msk [vmem:[#allocation7] sm:$0xff] %vm78, %v876
    // Predicated region
    $region34: #{tpu_custom_call.1} parent=1 // pred_check
      _
    $region35: #{tpu_custom_call.1} parent=1 // pred_check_branch
      %880 = sbr.rel (0) target = $region37
    $region36: #{tpu_custom_call.1} parent=1 // pred_region
      %882 = vsyncadd [#allocation4], 0
      %s884 = sshll.u32 [#allocation7], 4
      %s885 = int_to_ptr.vmem [resolvable:$true] %s884
      %s886 = sshll.u32 %s6, 4
      %s887 = int_to_ptr.hbm [resolvable:$true] %s886
      %889 = dma.vmem_to_hbm [thread:$0]  %s885, 128, %s887, [#allocation4]
    $region37: #{tpu_custom_call.1} parent=1 // pred_fallthru
      _
    // Predicated region
    $region38: #{tpu_custom_call.1} parent=1 // pred_check
      _
    $region39: #{tpu_custom_call.1} parent=1 // pred_check_branch
      %891 = sbr.rel (0) target = $region41
    $region40: #{tpu_custom_call.1} parent=1 // pred_region
      %893 = dma.done [#allocation4], 128
    $region41: #{tpu_custom_call.1} parent=1 // pred_fallthru
      _
    %894 = vsyncpa [#allocation3], 1
    %895 = vsyncpa [#allocation6], 1
    %896 = vsyncpa [#allocation4], 1

</llo_original>
